<compile_context>
chip_gen: v7x
topology: tpu7x:2x2x1
jax: 0.10.0
libtpu: 0.0.40
codegen_flags: <defaults>
</compile_context>

<pallas_src>
import functools
import math

import jax
import jax.numpy as jnp
import numpy as np
from jax import lax
from jax.experimental import pallas as pl
from jax.experimental.pallas import tpu as pltpu

BN_EPS = 1e-5


# ----------------------------------------------------------------------------
# helpers
# ----------------------------------------------------------------------------
def _choose_s_tile(S):
    """Largest lane-dense tile (multiple of 128) dividing S; prefer >=2 tiles."""
    for ts in (512, 256, 128):
        if S % ts == 0 and S // ts >= 2:
            return ts
    for ts in (512, 256, 128):
        if S % ts == 0:
            return ts
    return S


def _vmem_limit_bytes(single_buffer_bytes):
    """Explicit scoped-VMEM request (v5e default is only 16 MiB scoped)."""
    need = 2 * single_buffer_bytes + (4 << 20)      # double-buffered streams + headroom
    return int(min(max(need, 32 << 20), 48 << 20))  # stay under v7x's 64 MiB VMEM


# ----------------------------------------------------------------------------
# PatchMerging: grouped 1x1 conv (groups = dim, bias=False) + BatchNorm2d (eval)
# ----------------------------------------------------------------------------
def _patch_merge_kernel(g0_ref, g1_ref, g2_ref, g3_ref, w_ref, shift_ref, o_ref):
    # g*_ref  : (1, C, TS) f32 -- tap i of the grouped conv, already gathered so
    #           that channel index == output channel (lane-dense S on last axis)
    # w_ref   : (1, C, 4)  f32 -- conv weight with BN scale pre-folded
    # shift_ref: (1, C, 1) f32 -- folded BN shift
    w = w_ref[...]
    y = (g0_ref[...] * w[:, :, 0:1]
         + g1_ref[...] * w[:, :, 1:2]
         + g2_ref[...] * w[:, :, 2:3]
         + g3_ref[...] * w[:, :, 3:4])
    o_ref[...] = y + shift_ref[...]


def patch_merging(x, conv_w, bn_scale, bn_shift):
    """x: (B, C, H, W) -> (B, C, H//2, W//2). Matches PatchMerging.forward (eval BN)."""
    B, C, H, W = x.shape
    Hh, Wh = H // 2, W // 2
    S = Hh * Wh
    x0 = x[:, :, 0::2, 0::2]
    x1 = x[:, :, 1::2, 0::2]
    x2 = x[:, :, 0::2, 1::2]
    x3 = x[:, :, 1::2, 1::2]
    # PyTorch groups=dim conv: output channel o reads concat channels 4o..4o+3,
    # i.e. cat.reshape(B, C, 4, S)[:, o, i, :].  Slice into 4 lane-dense slabs.
    cat = jnp.concatenate([x0, x1, x2, x3], axis=1).reshape(B, C, 4, S)
    g = [cat[:, :, i, :].astype(jnp.float32) for i in range(4)]
    # Fold eval-mode BatchNorm scale into the conv weight (one less full pass).
    w_folded = (conv_w * bn_scale[:, None]).reshape(1, C, 4).astype(jnp.float32)
    shift = bn_shift.reshape(1, C, 1).astype(jnp.float32)

    ts = _choose_s_tile(S)
    grid = (B, S // ts)
    blk_bytes = (5 * C * ts + 5 * C) * 4  # 4 slabs + out + w/shift, f32

    out = pl.pallas_call(
        _patch_merge_kernel,
        out_shape=jax.ShapeDtypeStruct((B, C, S), jnp.float32),
        grid=grid,
        in_specs=[pl.BlockSpec((1, C, ts), lambda b, s: (b, 0, s)) for _ in range(4)]
        + [
            pl.BlockSpec((1, C, 4), lambda b, s: (0, 0, 0)),
            pl.BlockSpec((1, C, 1), lambda b, s: (0, 0, 0)),
        ],
        out_specs=pl.BlockSpec((1, C, ts), lambda b, s: (b, 0, s)),
        compiler_params=pltpu.CompilerParams(
            dimension_semantics=("parallel", "parallel"),
            vmem_limit_bytes=_vmem_limit_bytes(blk_bytes),
        ),
    )(*g, w_folded, shift)
    return out.reshape(B, C, Hh, Wh)


def spatial2channel(x, layer_params):
    # TODO(synk): later layers have S << 128; a fully fused chain (the merges are
    # per-channel affine, so they compose) would keep intermediates in VMEM.
    for conv_w, bn_scale, bn_shift in layer_params:
        x = patch_merging(x, conv_w, bn_scale, bn_shift)
    return x


# ----------------------------------------------------------------------------
# channelAttention hot path: dots, softmax, (attn @ W) @ x, relu
# ----------------------------------------------------------------------------
def _channel_attn_kernel(q_ref, k_ref, w_ref, x_ref, o_ref, m_ref, *, scale):
    # grid = (B, S-tiles).  q/k: (1, C, Hq) bf16; w: (C, C) bf16; x: (1, C, TS) bf16
    # o: (1, C, TS) bf16; m_ref: (C, C) bf16 VMEM scratch (persists across S-tiles).
    @pl.when(pl.program_id(1) == 0)
    def _():
        # Hq is tiny (1 in the test): keep this degenerate contraction in f32;
        # it runs once per batch and is negligible next to the per-tile matmul.
        dots = lax.dot_general(
            q_ref[0].astype(jnp.float32),
            k_ref[0].astype(jnp.float32),
            dimension_numbers=(((1,), (1,)), ((), ())),
            preferred_element_type=jnp.float32,
        ) * scale                                                   # (C, C)
        dots = dots - jnp.max(dots, axis=-1, keepdims=True)
        e = jnp.exp(dots)
        attn = e * pl.reciprocal(jnp.sum(e, axis=-1, keepdims=True), approx=True)
        # TODO(synk): nn.Dropout on attn is identity here (inference); training RNG drop not implemented.
        # Fuse attn @ W once per batch so each S-tile needs a single MXU matmul.
        m = jnp.dot(attn.astype(jnp.bfloat16), w_ref[...],
                    preferred_element_type=jnp.float32)             # (C, C)
        m_ref[...] = m.astype(jnp.bfloat16)

    out = jnp.dot(m_ref[...], x_ref[0], preferred_element_type=jnp.float32)  # (C, TS)
    o_ref[0] = jnp.maximum(out, 0.0).astype(o_ref.dtype)            # relu in-kernel


def channel_attention_forward(x, params):
    B, C, H, W = x.shape
    S = H * W
    shortcut = x

    q = spatial2channel(x, params["q_layers"])        # (B, C, Hq, Wq), Wq == 1
    k = spatial2channel(x, params["k_layers"])
    assert q.shape[-1] == 1, "squeeze(-1) in the reference requires W to collapse to 1"
    Hq = q.shape[2]
    q = q[..., 0].astype(jnp.bfloat16)                # (B, C, Hq)
    k = k[..., 0].astype(jnp.bfloat16)
    w = params["weights"].astype(jnp.bfloat16)        # (C, C)
    xflat = x.reshape(B, C, S).astype(jnp.bfloat16)
    scale = float(C) ** -0.5

    ts = _choose_s_tile(S)
    ns = S // ts
    blk_bytes = (2 * C * Hq + 2 * C * C + 2 * C * ts) * 2  # bf16 streams + scratch

    z = pl.pallas_call(
        functools.partial(_channel_attn_kernel, scale=scale),
        out_shape=jax.ShapeDtypeStruct((B, C, S), jnp.bfloat16),
        grid=(B, ns),
        in_specs=[
            pl.BlockSpec((1, C, Hq), lambda b, s: (b, 0, 0)),
            pl.BlockSpec((1, C, Hq), lambda b, s: (b, 0, 0)),
            pl.BlockSpec((C, C), lambda b, s: (0, 0)),
            pl.BlockSpec((1, C, ts), lambda b, s: (b, 0, s)),
        ],
        out_specs=pl.BlockSpec((1, C, ts), lambda b, s: (b, 0, s)),
        scratch_shapes=[pltpu.VMEM((C, C), jnp.bfloat16)],
        compiler_params=pltpu.CompilerParams(
            # B shards across cores; the S axis carries the per-batch (C, C)
            # scratch so it must stay sequential ("arbitrary").
            dimension_semantics=("parallel", "arbitrary"),
            vmem_limit_bytes=_vmem_limit_bytes(blk_bytes),
        ),
    )(q, k, w, xflat)

    # Exact reproduction of out.unsqueeze(-1).transpose(2, 1).reshape(B, C, H, W);
    # relu already applied in-kernel (elementwise, commutes with the reshape),
    # residual added here so XLA fuses it with the transpose.
    out = jnp.transpose(z.astype(jnp.float32), (0, 2, 1)).reshape(B, C, H, W)
    return out + shortcut


# ----------------------------------------------------------------------------
# Deterministic parameter init (synthetic, matches module shapes/conventions)
# ----------------------------------------------------------------------------
def init_params(key, dim, input_resolution):
    H, W = input_resolution
    n_layers = W // 4
    keys = jax.random.split(key, 2 * n_layers + 1)

    std = 1.0 / math.sqrt(dim)
    weights = jax.random.uniform(keys[0], (dim, dim), jnp.float32, minval=-std, maxval=std)

    # BatchNorm2d defaults (eval): gamma=1, beta=0, running_mean=0, running_var=1
    bn_scale = jnp.full((dim,), 1.0 / math.sqrt(1.0 + BN_EPS), jnp.float32)
    bn_shift = jnp.zeros((dim,), jnp.float32)

    def make_layers(ks):
        layers = []
        for kk in ks:
            # Conv2d(dim*4, dim, 1, groups=dim, bias=False).weight has shape (dim, 4, 1, 1)
            bound = 1.0 / math.sqrt(4.0)
            w = jax.random.uniform(kk, (dim, 4), jnp.float32, minval=-bound, maxval=bound)
            layers.append((w, bn_scale, bn_shift))
        return layers

    return {
        "weights": weights,
        "q_layers": make_layers(keys[1:1 + n_layers]),
        "k_layers": make_layers(keys[1 + n_layers:]),
    }


# ----------------------------------------------------------------------------
# Pure-JAX f32 reference (mirrors the PyTorch forward) for a correctness check
# ----------------------------------------------------------------------------
def reference_forward(x, params):
    B, C, H, W = x.shape

    def merge_ref(y, w, sc, sh):
        y0 = y[:, :, 0::2, 0::2]
        y1 = y[:, :, 1::2, 0::2]
        y2 = y[:, :, 0::2, 1::2]
        y3 = y[:, :, 1::2, 1::2]
        cat = jnp.concatenate([y0, y1, y2, y3], axis=1)
        _, _, Hh, Wh = cat.shape
        y4 = cat.reshape(B, C, 4, Hh, Wh)
        out = jnp.einsum("bcihw,ci->bchw", y4, w)
        return out * sc[None, :, None, None] + sh[None, :, None, None]

    def s2c(y, layers):
        for w, sc, sh in layers:
            y = merge_ref(y, w, sc, sh)
        return y

    shortcut = x
    q = s2c(x, params["q_layers"])[..., 0]
    k = s2c(x, params["k_layers"])[..., 0]
    dots = jnp.einsum("bch,bdh->bcd", q, k) * (C ** -0.5)
    attn = jax.nn.softmax(dots, axis=-1)
    xflat = x.reshape(B, C, H * W)
    support = jnp.einsum("cd,bds->bcs", params["weights"], xflat)
    out = jnp.einsum("bcd,bds->bcs", attn, support)
    out = jnp.transpose(out, (0, 2, 1)).reshape(B, C, H, W)
    out = jax.nn.relu(out)
    return out + shortcut


if __name__ == "__main__":
    B, dim, H, W = 2, 4, 16, 16   # W//4 = 4 merging steps collapse 16x16 -> 1x1
    key = jax.random.PRNGKey(0)
    kx, kp = jax.random.split(key)
    x = jax.random.normal(kx, (B, dim, H, W), jnp.float32)
    params = init_params(kp, dim, (H, W))

    out = jax.jit(channel_attention_forward)(x, params)
    out = jax.block_until_ready(out)

    ref = reference_forward(x, params)
    # bf16 MXU operands + approx reciprocal in the softmax => relaxed tolerance
    # vs. the pure-f32 reference.
    np.testing.assert_allclose(np.asarray(out), np.asarray(ref), rtol=2e-2, atol=2e-2)
    print("KERNEL_OK")
</pallas_src>

<mosaic_0001>
module attributes {stable_mosaic.version = 11 : i64} {
  func.func @_patch_merge_kernel(%arg0: i32, %arg1: i32, %arg2: memref<1x4x64xf32, #tpu.memory_space<vmem>>, %arg3: memref<1x4x64xf32, #tpu.memory_space<vmem>>, %arg4: memref<1x4x64xf32, #tpu.memory_space<vmem>>, %arg5: memref<1x4x64xf32, #tpu.memory_space<vmem>>, %arg6: memref<1x4x4xf32, #tpu.memory_space<vmem>>, %arg7: memref<1x4x1xf32, #tpu.memory_space<vmem>>, %arg8: memref<1x4x64xf32, #tpu.memory_space<vmem>>) attributes {dimension_semantics = [#tpu.dimension_semantics<parallel>, #tpu.dimension_semantics<parallel>], iteration_bounds = array<i64: 2, 1>, scalar_prefetch = 0 : i64, scratch_operands = 0 : i64, tpu.core_type = #tpu.core_type<tc>, window_params = [{transform_indices = @transform_0, window_bounds = array<i64: 1, 4, 64>}, {transform_indices = @transform_1, window_bounds = array<i64: 1, 4, 64>}, {transform_indices = @transform_2, window_bounds = array<i64: 1, 4, 64>}, {transform_indices = @transform_3, window_bounds = array<i64: 1, 4, 64>}, {pipeline_mode = #tpu.pipeline_mode<synchronous>, transform_indices = @transform_4, window_bounds = array<i64: 1, 4, 4>}, {pipeline_mode = #tpu.pipeline_mode<synchronous>, transform_indices = @transform_5, window_bounds = array<i64: 1, 4, 1>}, {transform_indices = @transform_6, window_bounds = array<i64: 1, 4, 64>}]} {
    %c0 = arith.constant 0 : index
    %c0_0 = arith.constant 0 : index
    %c0_1 = arith.constant 0 : index
    %0 = vector.load %arg6[%c0, %c0_0, %c0_1] : memref<1x4x4xf32, #tpu.memory_space<vmem>>, vector<1x4x4xf32>
    %c0_2 = arith.constant 0 : index
    %c0_3 = arith.constant 0 : index
    %c0_4 = arith.constant 0 : index
    %1 = vector.load %arg2[%c0_2, %c0_3, %c0_4] : memref<1x4x64xf32, #tpu.memory_space<vmem>>, vector<1x4x64xf32>
    %2 = vector.extract_strided_slice %0 {offsets = [0, 0, 0], sizes = [1, 4, 1], strides = [1, 1, 1]} : vector<1x4x4xf32> to vector<1x4x1xf32>
    %3 = vector.broadcast %2 : vector<1x4x1xf32> to vector<1x4x64xf32>
    %4 = arith.mulf %1, %3 : vector<1x4x64xf32>
    %c0_5 = arith.constant 0 : index
    %c0_6 = arith.constant 0 : index
    %c0_7 = arith.constant 0 : index
    %5 = vector.load %arg3[%c0_5, %c0_6, %c0_7] : memref<1x4x64xf32, #tpu.memory_space<vmem>>, vector<1x4x64xf32>
    %6 = vector.extract_strided_slice %0 {offsets = [0, 0, 1], sizes = [1, 4, 1], strides = [1, 1, 1]} : vector<1x4x4xf32> to vector<1x4x1xf32>
    %7 = vector.broadcast %6 : vector<1x4x1xf32> to vector<1x4x64xf32>
    %8 = arith.mulf %5, %7 : vector<1x4x64xf32>
    %9 = arith.addf %4, %8 : vector<1x4x64xf32>
    %c0_8 = arith.constant 0 : index
    %c0_9 = arith.constant 0 : index
    %c0_10 = arith.constant 0 : index
    %10 = vector.load %arg4[%c0_8, %c0_9, %c0_10] : memref<1x4x64xf32, #tpu.memory_space<vmem>>, vector<1x4x64xf32>
    %11 = vector.extract_strided_slice %0 {offsets = [0, 0, 2], sizes = [1, 4, 1], strides = [1, 1, 1]} : vector<1x4x4xf32> to vector<1x4x1xf32>
    %12 = vector.broadcast %11 : vector<1x4x1xf32> to vector<1x4x64xf32>
    %13 = arith.mulf %10, %12 : vector<1x4x64xf32>
    %14 = arith.addf %9, %13 : vector<1x4x64xf32>
    %c0_11 = arith.constant 0 : index
    %c0_12 = arith.constant 0 : index
    %c0_13 = arith.constant 0 : index
    %15 = vector.load %arg5[%c0_11, %c0_12, %c0_13] : memref<1x4x64xf32, #tpu.memory_space<vmem>>, vector<1x4x64xf32>
    %16 = vector.extract_strided_slice %0 {offsets = [0, 0, 3], sizes = [1, 4, 1], strides = [1, 1, 1]} : vector<1x4x4xf32> to vector<1x4x1xf32>
    %17 = vector.broadcast %16 : vector<1x4x1xf32> to vector<1x4x64xf32>
    %18 = arith.mulf %15, %17 : vector<1x4x64xf32>
    %19 = arith.addf %14, %18 : vector<1x4x64xf32>
    %c0_14 = arith.constant 0 : index
    %c0_15 = arith.constant 0 : index
    %c0_16 = arith.constant 0 : index
    %20 = vector.load %arg7[%c0_14, %c0_15, %c0_16] : memref<1x4x1xf32, #tpu.memory_space<vmem>>, vector<1x4x1xf32>
    %21 = vector.broadcast %20 : vector<1x4x1xf32> to vector<1x4x64xf32>
    %22 = arith.addf %19, %21 : vector<1x4x64xf32>
    %c0_17 = arith.constant 0 : index
    %c0_18 = arith.constant 0 : index
    %c0_19 = arith.constant 0 : index
    %23 = vector.load %arg8[%c0_17, %c0_18, %c0_19] : memref<1x4x64xf32, #tpu.memory_space<vmem>>, vector<1x4x64xf32>
    tpu.vector_store %arg8[%c0_17, %c0_18, %c0_19], %22 {strides = array<i32>} : memref<1x4x64xf32, #tpu.memory_space<vmem>>, vector<1x4x64xf32>,
    return
  }
  func.func @transform_0(%arg0: i32, %arg1: i32) -> (i32, i32, i32) {
    %c0_i32 = arith.constant 0 : i32
    %c0_i32_0 = arith.constant 0 : i32
    return %arg0, %c0_i32, %arg1 : i32, i32, i32
  }
  func.func @transform_1(%arg0: i32, %arg1: i32) -> (i32, i32, i32) {
    %c0_i32 = arith.constant 0 : i32
    %c0_i32_0 = arith.constant 0 : i32
    return %arg0, %c0_i32, %arg1 : i32, i32, i32
  }
  func.func @transform_2(%arg0: i32, %arg1: i32) -> (i32, i32, i32) {
    %c0_i32 = arith.constant 0 : i32
    %c0_i32_0 = arith.constant 0 : i32
    return %arg0, %c0_i32, %arg1 : i32, i32, i32
  }
  func.func @transform_3(%arg0: i32, %arg1: i32) -> (i32, i32, i32) {
    %c0_i32 = arith.constant 0 : i32
    %c0_i32_0 = arith.constant 0 : i32
    return %arg0, %c0_i32, %arg1 : i32, i32, i32
  }
  func.func @transform_4(%arg0: i32, %arg1: i32) -> (i32, i32, i32) {
    %c0_i32 = arith.constant 0 : i32
    %c0_i32_0 = arith.constant 0 : i32
    %c0_i32_1 = arith.constant 0 : i32
    %c0_i32_2 = arith.constant 0 : i32
    return %c0_i32, %c0_i32_0, %c0_i32_1 : i32, i32, i32
  }
  func.func @transform_5(%arg0: i32, %arg1: i32) -> (i32, i32, i32) {
    %c0_i32 = arith.constant 0 : i32
    %c0_i32_0 = arith.constant 0 : i32
    %c0_i32_1 = arith.constant 0 : i32
    %c0_i32_2 = arith.constant 0 : i32
    return %c0_i32, %c0_i32_0, %c0_i32_1 : i32, i32, i32
  }
  func.func @transform_6(%arg0: i32, %arg1: i32) -> (i32, i32, i32) {
    %c0_i32 = arith.constant 0 : i32
    %c0_i32_0 = arith.constant 0 : i32
    return %arg0, %c0_i32, %arg1 : i32, i32, i32
  }
}

module attributes {stable_mosaic.version = 11 : i64} {
  func.func @_patch_merge_kernel(%arg0: i32, %arg1: i32, %arg2: memref<1x4x16xf32, #tpu.memory_space<vmem>>, %arg3: memref<1x4x16xf32, #tpu.memory_space<vmem>>, %arg4: memref<1x4x16xf32, #tpu.memory_space<vmem>>, %arg5: memref<1x4x16xf32, #tpu.memory_space<vmem>>, %arg6: memref<1x4x4xf32, #tpu.memory_space<vmem>>, %arg7: memref<1x4x1xf32, #tpu.memory_space<vmem>>, %arg8: memref<1x4x16xf32, #tpu.memory_space<vmem>>) attributes {dimension_semantics = [#tpu.dimension_semantics<parallel>, #tpu.dimension_semantics<parallel>], iteration_bounds = array<i64: 2, 1>, scalar_prefetch = 0 : i64, scratch_operands = 0 : i64, tpu.core_type = #tpu.core_type<tc>, window_params = [{transform_indices = @transform_0, window_bounds = array<i64: 1, 4, 16>}, {transform_indices = @transform_1, window_bounds = array<i64: 1, 4, 16>}, {transform_indices = @transform_2, window_bounds = array<i64: 1, 4, 16>}, {transform_indices = @transform_3, window_bounds = array<i64: 1, 4, 16>}, {pipeline_mode = #tpu.pipeline_mode<synchronous>, transform_indices = @transform_4, window_bounds = array<i64: 1, 4, 4>}, {pipeline_mode = #tpu.pipeline_mode<synchronous>, transform_indices = @transform_5, window_bounds = array<i64: 1, 4, 1>}, {transform_indices = @transform_6, window_bounds = array<i64: 1, 4, 16>}]} {
    %c0 = arith.constant 0 : index
    %c0_0 = arith.constant 0 : index
    %c0_1 = arith.constant 0 : index
    %0 = vector.load %arg6[%c0, %c0_0, %c0_1] : memref<1x4x4xf32, #tpu.memory_space<vmem>>, vector<1x4x4xf32>
    %c0_2 = arith.constant 0 : index
    %c0_3 = arith.constant 0 : index
    %c0_4 = arith.constant 0 : index
    %1 = vector.load %arg2[%c0_2, %c0_3, %c0_4] : memref<1x4x16xf32, #tpu.memory_space<vmem>>, vector<1x4x16xf32>
    %2 = vector.extract_strided_slice %0 {offsets = [0, 0, 0], sizes = [1, 4, 1], strides = [1, 1, 1]} : vector<1x4x4xf32> to vector<1x4x1xf32>
    %3 = vector.broadcast %2 : vector<1x4x1xf32> to vector<1x4x16xf32>
    %4 = arith.mulf %1, %3 : vector<1x4x16xf32>
    %c0_5 = arith.constant 0 : index
    %c0_6 = arith.constant 0 : index
    %c0_7 = arith.constant 0 : index
    %5 = vector.load %arg3[%c0_5, %c0_6, %c0_7] : memref<1x4x16xf32, #tpu.memory_space<vmem>>, vector<1x4x16xf32>
    %6 = vector.extract_strided_slice %0 {offsets = [0, 0, 1], sizes = [1, 4, 1], strides = [1, 1, 1]} : vector<1x4x4xf32> to vector<1x4x1xf32>
    %7 = vector.broadcast %6 : vector<1x4x1xf32> to vector<1x4x16xf32>
    %8 = arith.mulf %5, %7 : vector<1x4x16xf32>
    %9 = arith.addf %4, %8 : vector<1x4x16xf32>
    %c0_8 = arith.constant 0 : index
    %c0_9 = arith.constant 0 : index
    %c0_10 = arith.constant 0 : index
    %10 = vector.load %arg4[%c0_8, %c0_9, %c0_10] : memref<1x4x16xf32, #tpu.memory_space<vmem>>, vector<1x4x16xf32>
    %11 = vector.extract_strided_slice %0 {offsets = [0, 0, 2], sizes = [1, 4, 1], strides = [1, 1, 1]} : vector<1x4x4xf32> to vector<1x4x1xf32>
    %12 = vector.broadcast %11 : vector<1x4x1xf32> to vector<1x4x16xf32>
    %13 = arith.mulf %10, %12 : vector<1x4x16xf32>
    %14 = arith.addf %9, %13 : vector<1x4x16xf32>
    %c0_11 = arith.constant 0 : index
    %c0_12 = arith.constant 0 : index
    %c0_13 = arith.constant 0 : index
    %15 = vector.load %arg5[%c0_11, %c0_12, %c0_13] : memref<1x4x16xf32, #tpu.memory_space<vmem>>, vector<1x4x16xf32>
    %16 = vector.extract_strided_slice %0 {offsets = [0, 0, 3], sizes = [1, 4, 1], strides = [1, 1, 1]} : vector<1x4x4xf32> to vector<1x4x1xf32>
    %17 = vector.broadcast %16 : vector<1x4x1xf32> to vector<1x4x16xf32>
    %18 = arith.mulf %15, %17 : vector<1x4x16xf32>
    %19 = arith.addf %14, %18 : vector<1x4x16xf32>
    %c0_14 = arith.constant 0 : index
    %c0_15 = arith.constant 0 : index
    %c0_16 = arith.constant 0 : index
    %20 = vector.load %arg7[%c0_14, %c0_15, %c0_16] : memref<1x4x1xf32, #tpu.memory_space<vmem>>, vector<1x4x1xf32>
    %21 = vector.broadcast %20 : vector<1x4x1xf32> to vector<1x4x16xf32>
    %22 = arith.addf %19, %21 : vector<1x4x16xf32>
    %c0_17 = arith.constant 0 : index
    %c0_18 = arith.constant 0 : index
    %c0_19 = arith.constant 0 : index
    %23 = vector.load %arg8[%c0_17, %c0_18, %c0_19] : memref<1x4x16xf32, #tpu.memory_space<vmem>>, vector<1x4x16xf32>
    tpu.vector_store %arg8[%c0_17, %c0_18, %c0_19], %22 {strides = array<i32>} : memref<1x4x16xf32, #tpu.memory_space<vmem>>, vector<1x4x16xf32>,
    return
  }
  func.func @transform_0(%arg0: i32, %arg1: i32) -> (i32, i32, i32) {
    %c0_i32 = arith.constant 0 : i32
    %c0_i32_0 = arith.constant 0 : i32
    return %arg0, %c0_i32, %arg1 : i32, i32, i32
  }
  func.func @transform_1(%arg0: i32, %arg1: i32) -> (i32, i32, i32) {
    %c0_i32 = arith.constant 0 : i32
    %c0_i32_0 = arith.constant 0 : i32
    return %arg0, %c0_i32, %arg1 : i32, i32, i32
  }
  func.func @transform_2(%arg0: i32, %arg1: i32) -> (i32, i32, i32) {
    %c0_i32 = arith.constant 0 : i32
    %c0_i32_0 = arith.constant 0 : i32
    return %arg0, %c0_i32, %arg1 : i32, i32, i32
  }
  func.func @transform_3(%arg0: i32, %arg1: i32) -> (i32, i32, i32) {
    %c0_i32 = arith.constant 0 : i32
    %c0_i32_0 = arith.constant 0 : i32
    return %arg0, %c0_i32, %arg1 : i32, i32, i32
  }
  func.func @transform_4(%arg0: i32, %arg1: i32) -> (i32, i32, i32) {
    %c0_i32 = arith.constant 0 : i32
    %c0_i32_0 = arith.constant 0 : i32
    %c0_i32_1 = arith.constant 0 : i32
    %c0_i32_2 = arith.constant 0 : i32
    return %c0_i32, %c0_i32_0, %c0_i32_1 : i32, i32, i32
  }
  func.func @transform_5(%arg0: i32, %arg1: i32) -> (i32, i32, i32) {
    %c0_i32 = arith.constant 0 : i32
    %c0_i32_0 = arith.constant 0 : i32
    %c0_i32_1 = arith.constant 0 : i32
    %c0_i32_2 = arith.constant 0 : i32
    return %c0_i32, %c0_i32_0, %c0_i32_1 : i32, i32, i32
  }
  func.func @transform_6(%arg0: i32, %arg1: i32) -> (i32, i32, i32) {
    %c0_i32 = arith.constant 0 : i32
    %c0_i32_0 = arith.constant 0 : i32
    return %arg0, %c0_i32, %arg1 : i32, i32, i32
  }
}

module attributes {stable_mosaic.version = 11 : i64} {
  func.func @_patch_merge_kernel(%arg0: i32, %arg1: i32, %arg2: memref<1x4x4xf32, #tpu.memory_space<vmem>>, %arg3: memref<1x4x4xf32, #tpu.memory_space<vmem>>, %arg4: memref<1x4x4xf32, #tpu.memory_space<vmem>>, %arg5: memref<1x4x4xf32, #tpu.memory_space<vmem>>, %arg6: memref<1x4x4xf32, #tpu.memory_space<vmem>>, %arg7: memref<1x4x1xf32, #tpu.memory_space<vmem>>, %arg8: memref<1x4x4xf32, #tpu.memory_space<vmem>>) attributes {dimension_semantics = [#tpu.dimension_semantics<parallel>, #tpu.dimension_semantics<parallel>], iteration_bounds = array<i64: 2, 1>, scalar_prefetch = 0 : i64, scratch_operands = 0 : i64, tpu.core_type = #tpu.core_type<tc>, window_params = [{transform_indices = @transform_0, window_bounds = array<i64: 1, 4, 4>}, {transform_indices = @transform_1, window_bounds = array<i64: 1, 4, 4>}, {transform_indices = @transform_2, window_bounds = array<i64: 1, 4, 4>}, {transform_indices = @transform_3, window_bounds = array<i64: 1, 4, 4>}, {pipeline_mode = #tpu.pipeline_mode<synchronous>, transform_indices = @transform_4, window_bounds = array<i64: 1, 4, 4>}, {pipeline_mode = #tpu.pipeline_mode<synchronous>, transform_indices = @transform_5, window_bounds = array<i64: 1, 4, 1>}, {transform_indices = @transform_6, window_bounds = array<i64: 1, 4, 4>}]} {
    %c0 = arith.constant 0 : index
    %c0_0 = arith.constant 0 : index
    %c0_1 = arith.constant 0 : index
    %0 = vector.load %arg6[%c0, %c0_0, %c0_1] : memref<1x4x4xf32, #tpu.memory_space<vmem>>, vector<1x4x4xf32>
    %c0_2 = arith.constant 0 : index
    %c0_3 = arith.constant 0 : index
    %c0_4 = arith.constant 0 : index
    %1 = vector.load %arg2[%c0_2, %c0_3, %c0_4] : memref<1x4x4xf32, #tpu.memory_space<vmem>>, vector<1x4x4xf32>
    %2 = vector.extract_strided_slice %0 {offsets = [0, 0, 0], sizes = [1, 4, 1], strides = [1, 1, 1]} : vector<1x4x4xf32> to vector<1x4x1xf32>
    %3 = vector.broadcast %2 : vector<1x4x1xf32> to vector<1x4x4xf32>
    %4 = arith.mulf %1, %3 : vector<1x4x4xf32>
    %c0_5 = arith.constant 0 : index
    %c0_6 = arith.constant 0 : index
    %c0_7 = arith.constant 0 : index
    %5 = vector.load %arg3[%c0_5, %c0_6, %c0_7] : memref<1x4x4xf32, #tpu.memory_space<vmem>>, vector<1x4x4xf32>
    %6 = vector.extract_strided_slice %0 {offsets = [0, 0, 1], sizes = [1, 4, 1], strides = [1, 1, 1]} : vector<1x4x4xf32> to vector<1x4x1xf32>
    %7 = vector.broadcast %6 : vector<1x4x1xf32> to vector<1x4x4xf32>
    %8 = arith.mulf %5, %7 : vector<1x4x4xf32>
    %9 = arith.addf %4, %8 : vector<1x4x4xf32>
    %c0_8 = arith.constant 0 : index
    %c0_9 = arith.constant 0 : index
    %c0_10 = arith.constant 0 : index
    %10 = vector.load %arg4[%c0_8, %c0_9, %c0_10] : memref<1x4x4xf32, #tpu.memory_space<vmem>>, vector<1x4x4xf32>
    %11 = vector.extract_strided_slice %0 {offsets = [0, 0, 2], sizes = [1, 4, 1], strides = [1, 1, 1]} : vector<1x4x4xf32> to vector<1x4x1xf32>
    %12 = vector.broadcast %11 : vector<1x4x1xf32> to vector<1x4x4xf32>
    %13 = arith.mulf %10, %12 : vector<1x4x4xf32>
    %14 = arith.addf %9, %13 : vector<1x4x4xf32>
    %c0_11 = arith.constant 0 : index
    %c0_12 = arith.constant 0 : index
    %c0_13 = arith.constant 0 : index
    %15 = vector.load %arg5[%c0_11, %c0_12, %c0_13] : memref<1x4x4xf32, #tpu.memory_space<vmem>>, vector<1x4x4xf32>
    %16 = vector.extract_strided_slice %0 {offsets = [0, 0, 3], sizes = [1, 4, 1], strides = [1, 1, 1]} : vector<1x4x4xf32> to vector<1x4x1xf32>
    %17 = vector.broadcast %16 : vector<1x4x1xf32> to vector<1x4x4xf32>
    %18 = arith.mulf %15, %17 : vector<1x4x4xf32>
    %19 = arith.addf %14, %18 : vector<1x4x4xf32>
    %c0_14 = arith.constant 0 : index
    %c0_15 = arith.constant 0 : index
    %c0_16 = arith.constant 0 : index
    %20 = vector.load %arg7[%c0_14, %c0_15, %c0_16] : memref<1x4x1xf32, #tpu.memory_space<vmem>>, vector<1x4x1xf32>
    %21 = vector.broadcast %20 : vector<1x4x1xf32> to vector<1x4x4xf32>
    %22 = arith.addf %19, %21 : vector<1x4x4xf32>
    %c0_17 = arith.constant 0 : index
    %c0_18 = arith.constant 0 : index
    %c0_19 = arith.constant 0 : index
    %23 = vector.load %arg8[%c0_17, %c0_18, %c0_19] : memref<1x4x4xf32, #tpu.memory_space<vmem>>, vector<1x4x4xf32>
    tpu.vector_store %arg8[%c0_17, %c0_18, %c0_19], %22 {strides = array<i32>} : memref<1x4x4xf32, #tpu.memory_space<vmem>>, vector<1x4x4xf32>,
    return
  }
  func.func @transform_0(%arg0: i32, %arg1: i32) -> (i32, i32, i32) {
    %c0_i32 = arith.constant 0 : i32
    %c0_i32_0 = arith.constant 0 : i32
    return %arg0, %c0_i32, %arg1 : i32, i32, i32
  }
  func.func @transform_1(%arg0: i32, %arg1: i32) -> (i32, i32, i32) {
    %c0_i32 = arith.constant 0 : i32
    %c0_i32_0 = arith.constant 0 : i32
    return %arg0, %c0_i32, %arg1 : i32, i32, i32
  }
  func.func @transform_2(%arg0: i32, %arg1: i32) -> (i32, i32, i32) {
    %c0_i32 = arith.constant 0 : i32
    %c0_i32_0 = arith.constant 0 : i32
    return %arg0, %c0_i32, %arg1 : i32, i32, i32
  }
  func.func @transform_3(%arg0: i32, %arg1: i32) -> (i32, i32, i32) {
    %c0_i32 = arith.constant 0 : i32
    %c0_i32_0 = arith.constant 0 : i32
    return %arg0, %c0_i32, %arg1 : i32, i32, i32
  }
  func.func @transform_4(%arg0: i32, %arg1: i32) -> (i32, i32, i32) {
    %c0_i32 = arith.constant 0 : i32
    %c0_i32_0 = arith.constant 0 : i32
    %c0_i32_1 = arith.constant 0 : i32
    %c0_i32_2 = arith.constant 0 : i32
    return %c0_i32, %c0_i32_0, %c0_i32_1 : i32, i32, i32
  }
  func.func @transform_5(%arg0: i32, %arg1: i32) -> (i32, i32, i32) {
    %c0_i32 = arith.constant 0 : i32
    %c0_i32_0 = arith.constant 0 : i32
    %c0_i32_1 = arith.constant 0 : i32
    %c0_i32_2 = arith.constant 0 : i32
    return %c0_i32, %c0_i32_0, %c0_i32_1 : i32, i32, i32
  }
  func.func @transform_6(%arg0: i32, %arg1: i32) -> (i32, i32, i32) {
    %c0_i32 = arith.constant 0 : i32
    %c0_i32_0 = arith.constant 0 : i32
    return %arg0, %c0_i32, %arg1 : i32, i32, i32
  }
}

module attributes {stable_mosaic.version = 11 : i64} {
  func.func @_patch_merge_kernel(%arg0: i32, %arg1: i32, %arg2: memref<1x4x1xf32, #tpu.memory_space<vmem>>, %arg3: memref<1x4x1xf32, #tpu.memory_space<vmem>>, %arg4: memref<1x4x1xf32, #tpu.memory_space<vmem>>, %arg5: memref<1x4x1xf32, #tpu.memory_space<vmem>>, %arg6: memref<1x4x4xf32, #tpu.memory_space<vmem>>, %arg7: memref<1x4x1xf32, #tpu.memory_space<vmem>>, %arg8: memref<1x4x1xf32, #tpu.memory_space<vmem>>) attributes {dimension_semantics = [#tpu.dimension_semantics<parallel>, #tpu.dimension_semantics<parallel>], iteration_bounds = array<i64: 2, 1>, scalar_prefetch = 0 : i64, scratch_operands = 0 : i64, tpu.core_type = #tpu.core_type<tc>, window_params = [{transform_indices = @transform_0, window_bounds = array<i64: 1, 4, 1>}, {transform_indices = @transform_1, window_bounds = array<i64: 1, 4, 1>}, {transform_indices = @transform_2, window_bounds = array<i64: 1, 4, 1>}, {transform_indices = @transform_3, window_bounds = array<i64: 1, 4, 1>}, {pipeline_mode = #tpu.pipeline_mode<synchronous>, transform_indices = @transform_4, window_bounds = array<i64: 1, 4, 4>}, {pipeline_mode = #tpu.pipeline_mode<synchronous>, transform_indices = @transform_5, window_bounds = array<i64: 1, 4, 1>}, {transform_indices = @transform_6, window_bounds = array<i64: 1, 4, 1>}]} {
    %c0 = arith.constant 0 : index
    %c0_0 = arith.constant 0 : index
    %c0_1 = arith.constant 0 : index
    %0 = vector.load %arg6[%c0, %c0_0, %c0_1] : memref<1x4x4xf32, #tpu.memory_space<vmem>>, vector<1x4x4xf32>
    %c0_2 = arith.constant 0 : index
    %c0_3 = arith.constant 0 : index
    %c0_4 = arith.constant 0 : index
    %1 = vector.load %arg2[%c0_2, %c0_3, %c0_4] : memref<1x4x1xf32, #tpu.memory_space<vmem>>, vector<1x4x1xf32>
    %2 = vector.extract_strided_slice %0 {offsets = [0, 0, 0], sizes = [1, 4, 1], strides = [1, 1, 1]} : vector<1x4x4xf32> to vector<1x4x1xf32>
    %3 = arith.mulf %1, %2 : vector<1x4x1xf32>
    %c0_5 = arith.constant 0 : index
    %c0_6 = arith.constant 0 : index
    %c0_7 = arith.constant 0 : index
    %4 = vector.load %arg3[%c0_5, %c0_6, %c0_7] : memref<1x4x1xf32, #tpu.memory_space<vmem>>, vector<1x4x1xf32>
    %5 = vector.extract_strided_slice %0 {offsets = [0, 0, 1], sizes = [1, 4, 1], strides = [1, 1, 1]} : vector<1x4x4xf32> to vector<1x4x1xf32>
    %6 = arith.mulf %4, %5 : vector<1x4x1xf32>
    %7 = arith.addf %3, %6 : vector<1x4x1xf32>
    %c0_8 = arith.constant 0 : index
    %c0_9 = arith.constant 0 : index
    %c0_10 = arith.constant 0 : index
    %8 = vector.load %arg4[%c0_8, %c0_9, %c0_10] : memref<1x4x1xf32, #tpu.memory_space<vmem>>, vector<1x4x1xf32>
    %9 = vector.extract_strided_slice %0 {offsets = [0, 0, 2], sizes = [1, 4, 1], strides = [1, 1, 1]} : vector<1x4x4xf32> to vector<1x4x1xf32>
    %10 = arith.mulf %8, %9 : vector<1x4x1xf32>
    %11 = arith.addf %7, %10 : vector<1x4x1xf32>
    %c0_11 = arith.constant 0 : index
    %c0_12 = arith.constant 0 : index
    %c0_13 = arith.constant 0 : index
    %12 = vector.load %arg5[%c0_11, %c0_12, %c0_13] : memref<1x4x1xf32, #tpu.memory_space<vmem>>, vector<1x4x1xf32>
    %13 = vector.extract_strided_slice %0 {offsets = [0, 0, 3], sizes = [1, 4, 1], strides = [1, 1, 1]} : vector<1x4x4xf32> to vector<1x4x1xf32>
    %14 = arith.mulf %12, %13 : vector<1x4x1xf32>
    %15 = arith.addf %11, %14 : vector<1x4x1xf32>
    %c0_14 = arith.constant 0 : index
    %c0_15 = arith.constant 0 : index
    %c0_16 = arith.constant 0 : index
    %16 = vector.load %arg7[%c0_14, %c0_15, %c0_16] : memref<1x4x1xf32, #tpu.memory_space<vmem>>, vector<1x4x1xf32>
    %17 = arith.addf %15, %16 : vector<1x4x1xf32>
    %c0_17 = arith.constant 0 : index
    %c0_18 = arith.constant 0 : index
    %c0_19 = arith.constant 0 : index
    %18 = vector.load %arg8[%c0_17, %c0_18, %c0_19] : memref<1x4x1xf32, #tpu.memory_space<vmem>>, vector<1x4x1xf32>
    tpu.vector_store %arg8[%c0_17, %c0_18, %c0_19], %17 {strides = array<i32>} : memref<1x4x1xf32, #tpu.memory_space<vmem>>, vector<1x4x1xf32>,
    return
  }
  func.func @transform_0(%arg0: i32, %arg1: i32) -> (i32, i32, i32) {
    %c0_i32 = arith.constant 0 : i32
    %c0_i32_0 = arith.constant 0 : i32
    return %arg0, %c0_i32, %arg1 : i32, i32, i32
  }
  func.func @transform_1(%arg0: i32, %arg1: i32) -> (i32, i32, i32) {
    %c0_i32 = arith.constant 0 : i32
    %c0_i32_0 = arith.constant 0 : i32
    return %arg0, %c0_i32, %arg1 : i32, i32, i32
  }
  func.func @transform_2(%arg0: i32, %arg1: i32) -> (i32, i32, i32) {
    %c0_i32 = arith.constant 0 : i32
    %c0_i32_0 = arith.constant 0 : i32
    return %arg0, %c0_i32, %arg1 : i32, i32, i32
  }
  func.func @transform_3(%arg0: i32, %arg1: i32) -> (i32, i32, i32) {
    %c0_i32 = arith.constant 0 : i32
    %c0_i32_0 = arith.constant 0 : i32
    return %arg0, %c0_i32, %arg1 : i32, i32, i32
  }
  func.func @transform_4(%arg0: i32, %arg1: i32) -> (i32, i32, i32) {
    %c0_i32 = arith.constant 0 : i32
    %c0_i32_0 = arith.constant 0 : i32
    %c0_i32_1 = arith.constant 0 : i32
    %c0_i32_2 = arith.constant 0 : i32
    return %c0_i32, %c0_i32_0, %c0_i32_1 : i32, i32, i32
  }
  func.func @transform_5(%arg0: i32, %arg1: i32) -> (i32, i32, i32) {
    %c0_i32 = arith.constant 0 : i32
    %c0_i32_0 = arith.constant 0 : i32
    %c0_i32_1 = arith.constant 0 : i32
    %c0_i32_2 = arith.constant 0 : i32
    return %c0_i32, %c0_i32_0, %c0_i32_1 : i32, i32, i32
  }
  func.func @transform_6(%arg0: i32, %arg1: i32) -> (i32, i32, i32) {
    %c0_i32 = arith.constant 0 : i32
    %c0_i32_0 = arith.constant 0 : i32
    return %arg0, %c0_i32, %arg1 : i32, i32, i32
  }
}

module attributes {stable_mosaic.version = 11 : i64} {
  func.func @_channel_attn_kernel(%arg0: i32, %arg1: i32, %arg2: memref<1x4x1xbf16, #tpu.memory_space<vmem>>, %arg3: memref<1x4x1xbf16, #tpu.memory_space<vmem>>, %arg4: memref<4x4xbf16, #tpu.memory_space<vmem>>, %arg5: memref<1x4x128xbf16, #tpu.memory_space<vmem>>, %arg6: memref<1x4x128xbf16, #tpu.memory_space<vmem>>, %arg7: memref<4x4xbf16, #tpu.memory_space<vmem>>) attributes {dimension_semantics = [#tpu.dimension_semantics<parallel>, #tpu.dimension_semantics<arbitrary>], iteration_bounds = array<i64: 2, 2>, scalar_prefetch = 0 : i64, scratch_operands = 1 : i64, tpu.core_type = #tpu.core_type<tc>, window_params = [{transform_indices = @transform_0, window_bounds = array<i64: 1, 4, 1>}, {transform_indices = @transform_1, window_bounds = array<i64: 1, 4, 1>}, {pipeline_mode = #tpu.pipeline_mode<synchronous>, transform_indices = @transform_2, window_bounds = array<i64: 4, 4>}, {transform_indices = @transform_3, window_bounds = array<i64: 1, 4, 128>}, {transform_indices = @transform_4, window_bounds = array<i64: 1, 4, 128>}]} {
    %c0_i32 = arith.constant 0 : i32
    %0 = arith.cmpi eq, %arg1, %c0_i32 : i32
    %1 = arith.extui %0 : i1 to i32
    %c0_i32_0 = arith.constant 0 : i32
    %2 = arith.cmpi ne, %1, %c0_i32_0 : i32
    scf.if %2 {
      %c0_9 = arith.constant 0 : index
      %c0_10 = arith.constant 0 : index
      %c0_11 = arith.constant 0 : index
      %13 = vector.load %arg2[%c0_9, %c0_10, %c0_11] : memref<1x4x1xbf16, #tpu.memory_space<vmem>>, vector<1x4x1xbf16>
      %14 = vector.shape_cast %13 : vector<1x4x1xbf16> to vector<4x1xbf16>
      %15 = arith.extf %14 : vector<4x1xbf16> to vector<4x1xf32>
      %c0_12 = arith.constant 0 : index
      %c0_13 = arith.constant 0 : index
      %c0_14 = arith.constant 0 : index
      %16 = vector.load %arg3[%c0_12, %c0_13, %c0_14] : memref<1x4x1xbf16, #tpu.memory_space<vmem>>, vector<1x4x1xbf16>
      %17 = vector.shape_cast %16 : vector<1x4x1xbf16> to vector<4x1xbf16>
      %18 = arith.extf %17 : vector<4x1xbf16> to vector<4x1xf32>
      %cst_15 = arith.constant dense<0.000000e+00> : vector<4x4xf32>
      %19 = tpu.matmul %15, %18, %cst_15 {dimension_numbers = #tpu.dot_dimension_numbers<[1], [1], [0], [0], [0, 0, 1, 0], [], []>} : vector<4x1xf32>, vector<4x1xf32>, vector<4x4xf32> -> vector<4x4xf32>
      %cst_16 = arith.constant 5.000000e-01 : f32
      %20 = vector.broadcast %cst_16 : f32 to vector<4x4xf32>
      %21 = arith.mulf %19, %20 : vector<4x4xf32>
      %cst_17 = arith.constant dense<0xFF800000> : vector<4xf32>
      %22 = vector.multi_reduction <maximumf>, %21, %cst_17 [1] : vector<4x4xf32> to vector<4xf32>
      %23 = vector.shape_cast %22 : vector<4xf32> to vector<4x1xf32>
      %24 = vector.broadcast %23 : vector<4x1xf32> to vector<4x4xf32>
      %25 = arith.subf %21, %24 : vector<4x4xf32>
      %26 = math.exp %25 : vector<4x4xf32>
      %cst_18 = arith.constant dense<0.000000e+00> : vector<4xf32>
      %27 = vector.multi_reduction <add>, %26, %cst_18 [1] : vector<4x4xf32> to vector<4xf32>
      %28 = vector.shape_cast %27 : vector<4xf32> to vector<4x1xf32>
      %29 = tpu.reciprocal %28 {approx = true} : vector<4x1xf32> -> vector<4x1xf32>
      %30 = vector.broadcast %29 : vector<4x1xf32> to vector<4x4xf32>
      %31 = arith.mulf %26, %30 : vector<4x4xf32>
      %32 = arith.truncf %31 : vector<4x4xf32> to vector<4x4xbf16>
      %c0_19 = arith.constant 0 : index
      %c0_20 = arith.constant 0 : index
      %33 = vector.load %arg4[%c0_19, %c0_20] : memref<4x4xbf16, #tpu.memory_space<vmem>>, vector<4x4xbf16>
      %cst_21 = arith.constant dense<0.000000e+00> : vector<4x4xf32>
      %34 = tpu.matmul %32, %33, %cst_21 {dimension_numbers = #tpu.dot_dimension_numbers<[1], [0], [0], [1], [0, 0, 1, 1], [], []>} : vector<4x4xbf16>, vector<4x4xbf16>, vector<4x4xf32> -> vector<4x4xf32>
      %35 = arith.truncf %34 : vector<4x4xf32> to vector<4x4xbf16>
      %c0_22 = arith.constant 0 : index
      %c0_23 = arith.constant 0 : index
      %36 = vector.load %arg7[%c0_22, %c0_23] : memref<4x4xbf16, #tpu.memory_space<vmem>>, vector<4x4xbf16>
      tpu.vector_store %arg7[%c0_22, %c0_23], %35 {strides = array<i32>} : memref<4x4xbf16, #tpu.memory_space<vmem>>, vector<4x4xbf16>,
    } else {
    }
    %c0 = arith.constant 0 : index
    %c0_1 = arith.constant 0 : index
    %3 = vector.load %arg7[%c0, %c0_1] : memref<4x4xbf16, #tpu.memory_space<vmem>>, vector<4x4xbf16>
    %c0_2 = arith.constant 0 : index
    %c0_3 = arith.constant 0 : index
    %c0_4 = arith.constant 0 : index
    %4 = vector.load %arg5[%c0_2, %c0_3, %c0_4] : memref<1x4x128xbf16, #tpu.memory_space<vmem>>, vector<1x4x128xbf16>
    %5 = vector.shape_cast %4 : vector<1x4x128xbf16> to vector<4x128xbf16>
    %cst = arith.constant dense<0.000000e+00> : vector<4x128xf32>
    %6 = tpu.matmul %3, %5, %cst {dimension_numbers = #tpu.dot_dimension_numbers<[1], [0], [0], [1], [0, 0, 1, 1], [], []>} : vector<4x4xbf16>, vector<4x128xbf16>, vector<4x128xf32> -> vector<4x128xf32>
    %cst_5 = arith.constant 0.000000e+00 : f32
    %7 = vector.broadcast %cst_5 : f32 to vector<4x128xf32>
    %8 = arith.maximumf %6, %7 : vector<4x128xf32>
    %9 = arith.truncf %8 : vector<4x128xf32> to vector<4x128xbf16>
    %c0_6 = arith.constant 0 : index
    %c0_7 = arith.constant 0 : index
    %c0_8 = arith.constant 0 : index
    %10 = vector.load %arg6[%c0_6, %c0_7, %c0_8] : memref<1x4x128xbf16, #tpu.memory_space<vmem>>, vector<1x4x128xbf16>
    %11 = vector.shape_cast %10 : vector<1x4x128xbf16> to vector<4x128xbf16>
    %12 = vector.shape_cast %9 : vector<4x128xbf16> to vector<1x4x128xbf16>
    tpu.vector_store %arg6[%c0_6, %c0_7, %c0_8], %12 {strides = array<i32>} : memref<1x4x128xbf16, #tpu.memory_space<vmem>>, vector<1x4x128xbf16>,
    return
  }
  func.func @transform_0(%arg0: i32, %arg1: i32) -> (i32, i32, i32) {
    %c0_i32 = arith.constant 0 : i32
    %c0_i32_0 = arith.constant 0 : i32
    %c0_i32_1 = arith.constant 0 : i32
    return %arg0, %c0_i32, %c0_i32_0 : i32, i32, i32
  }
  func.func @transform_1(%arg0: i32, %arg1: i32) -> (i32, i32, i32) {
    %c0_i32 = arith.constant 0 : i32
    %c0_i32_0 = arith.constant 0 : i32
    %c0_i32_1 = arith.constant 0 : i32
    return %arg0, %c0_i32, %c0_i32_0 : i32, i32, i32
  }
  func.func @transform_2(%arg0: i32, %arg1: i32) -> (i32, i32) {
    %c0_i32 = arith.constant 0 : i32
    %c0_i32_0 = arith.constant 0 : i32
    %c0_i32_1 = arith.constant 0 : i32
    return %c0_i32, %c0_i32_0 : i32, i32
  }
  func.func @transform_3(%arg0: i32, %arg1: i32) -> (i32, i32, i32) {
    %c0_i32 = arith.constant 0 : i32
    %c0_i32_0 = arith.constant 0 : i32
    return %arg0, %c0_i32, %arg1 : i32, i32, i32
  }
  func.func @transform_4(%arg0: i32, %arg1: i32) -> (i32, i32, i32) {
    %c0_i32 = arith.constant 0 : i32
    %c0_i32_0 = arith.constant 0 : i32
    return %arg0, %c0_i32, %arg1 : i32, i32, i32
  }
}

</mosaic_0001>

<llo_original>
// kernel: channel_attention_forward.13
$region0: #{channel_attention_forward.13}
  #allocation0 [shape = 'u32[]', space=smem, size = 0x4, offset = 0x4, fixed_abs, tag = 'smem constant byte address 0x4 - core index']
  #allocation1 [shape = 'u32[144,128]{1,0:T(1,128)}', space=vmem, size = 0x12000, scoped, tag = 'internal scratch']
  %s0 = inlined_call_operand.vmem [shape: f32[2,4,64], index: 0, kind: input, shape index: {}]
  %s1 = inlined_call_operand.vmem [shape: f32[2,4,64], index: 1, kind: input, shape index: {}]
  %s2 = inlined_call_operand.vmem [shape: f32[2,4,64], index: 2, kind: input, shape index: {}]
  %s3 = inlined_call_operand.vmem [shape: f32[2,4,64], index: 3, kind: input, shape index: {}]
  %s4 = inlined_call_operand.vmem [shape: f32[1,4,4], index: 4, kind: input, shape index: {}]
  %s5 = inlined_call_operand.vmem [shape: f32[1,4,1], index: 5, kind: input, shape index: {}]
  %s6 = inlined_call_operand.vmem [shape: f32[2,4,64], index: 6, kind: output, shape index: {}]
  %s7 = sld [smem:[#allocation0]]
  $region57: #{channel_attention_forward.13} parent=0
    _
  %s9 = ssub.s32 1, %s7
  %s10 = scalar_select 0, %s9, %s7
  loop: start=0, step=1, limit=4
  $region2: #{channel_attention_forward.13} parent=0 // loop_pre_header
    _
  $region3: #{channel_attention_forward.13} parent=0 // loop_header
    %s12 = sphi 0, %s16
    %p13 = scmp.ge.s32.totalorder %s12, 4
    %s19 = sphi 0, %s31
    %s20 = sphi 0, %s27
    %s21 = sphi 0, %s19
    %s22 = sphi 0, %s20
    %s23 = sphi 0, %s21
    %s24 = sphi 0, %s22
    %s36 = sphi 0, %s38
    %s39 = sphi 0, %s36
    %s40 = sphi 0, %s39
    %s56 = sphi 0, %s40
    %s64 = sphi 0, %s66
    %s67 = sphi 0, %s64
    %s68 = sphi 0, %s67
    %s84 = sphi 0, %s68
    %s92 = sphi 0, %s94
    %s95 = sphi 0, %s92
    %s96 = sphi 0, %s95
    %s112 = sphi 0, %s96
    %s120 = sphi 0, %s122
    %s123 = sphi 0, %s120
    %s124 = sphi 0, %s123
    %s140 = sphi 0, %s124
    %s144 = sphi 0, %s144
    %s146 = sphi 0, %s144
    %s147 = sphi 0, %s146
    %s161 = sphi 0, %s147
    %s165 = sphi 0, %s165
    %s167 = sphi 0, %s165
    %s168 = sphi 0, %s167
    %s182 = sphi 0, %s168
    %s190 = sphi 0, %s192
    %s193 = sphi 0, %s190
    %s194 = sphi 0, %s193
    %s210 = sphi 0, %s194
  $region4: #{channel_attention_forward.13} parent=0 // loop_header_branch
    %15 = sbr.rel (%p13) target = $region8
  $region5: #{channel_attention_forward.13} parent=0 // loop_body
    %s17 = ssub.s32 %s12, 1
    %s18 = ssub.s32 %s12, 2
    %s25 = sadd.s32 1, %s20
    %p26 = scmp.ge.s32.totalorder %s25, 1
    %s27 = scalar_select %p26, 0, %s25
    %s28 = sadd.s32 1, %s19
    %s29 = scalar_select %p26, %s28, %s19
    %p30 = scmp.ge.s32.totalorder %s29, 2
    %s31 = scalar_select %p30, 0, %s29
    %s32 = ssub.s32 %s19, %s31
    %s33 = ssub.s32 %s20, %s27
    %s34 = sor.u32 %s32, %s33
    %p35 = scmp.eq.s32.totalorder %s34, 0
    %s37 = sadd.s32 %s36, 1
    %s38 = scalar_select %p35, %s36, %s37
    %p41 = pneg %p35
    %p42 = scmp.eq.s32.totalorder %s12, 1
    %p43 = por %p41, %p42
    %p44 = scmp.ne.s32.totalorder %s36, %s39
    %p45 = scmp.eq.s32.totalorder %s12, 0
    %p46 = por %p44, %p45
    %p47 = scmp.ne.s32.totalorder %s36, %s39
    %p48 = scmp.eq.s32.totalorder %s17, 1
    %p49 = por %p47, %p48
    %p50 = scmp.ne.s32.totalorder %s39, %s40
    %p51 = scmp.eq.s32.totalorder %s17, 0
    %p52 = por %p50, %p51
    %p53 = scmp.ne.s32.totalorder %s39, %s40
    %p54 = scmp.eq.s32.totalorder %s18, 1
    %p55 = por %p53, %p54
    %p57 = scmp.ne.s32.totalorder %s40, %s56
    %p58 = scmp.eq.s32.totalorder %s18, 0
    %p59 = por %p57, %p58
    %s60 = ssub.s32 %s19, %s31
    %s61 = ssub.s32 %s20, %s27
    %s62 = sor.u32 %s60, %s61
    %p63 = scmp.eq.s32.totalorder %s62, 0
    %s65 = sadd.s32 %s64, 1
    %s66 = scalar_select %p63, %s64, %s65
    %p69 = pneg %p63
    %p70 = scmp.eq.s32.totalorder %s12, 1
    %p71 = por %p69, %p70
    %p72 = scmp.ne.s32.totalorder %s64, %s67
    %p73 = scmp.eq.s32.totalorder %s12, 0
    %p74 = por %p72, %p73
    %p75 = scmp.ne.s32.totalorder %s64, %s67
    %p76 = scmp.eq.s32.totalorder %s17, 1
    %p77 = por %p75, %p76
    %p78 = scmp.ne.s32.totalorder %s67, %s68
    %p79 = scmp.eq.s32.totalorder %s17, 0
    %p80 = por %p78, %p79
    %p81 = scmp.ne.s32.totalorder %s67, %s68
    %p82 = scmp.eq.s32.totalorder %s18, 1
    %p83 = por %p81, %p82
    %p85 = scmp.ne.s32.totalorder %s68, %s84
    %p86 = scmp.eq.s32.totalorder %s18, 0
    %p87 = por %p85, %p86
    %s88 = ssub.s32 %s19, %s31
    %s89 = ssub.s32 %s20, %s27
    %s90 = sor.u32 %s88, %s89
    %p91 = scmp.eq.s32.totalorder %s90, 0
    %s93 = sadd.s32 %s92, 1
    %s94 = scalar_select %p91, %s92, %s93
    %p97 = pneg %p91
    %p98 = scmp.eq.s32.totalorder %s12, 1
    %p99 = por %p97, %p98
    %p100 = scmp.ne.s32.totalorder %s92, %s95
    %p101 = scmp.eq.s32.totalorder %s12, 0
    %p102 = por %p100, %p101
    %p103 = scmp.ne.s32.totalorder %s92, %s95
    %p104 = scmp.eq.s32.totalorder %s17, 1
    %p105 = por %p103, %p104
    %p106 = scmp.ne.s32.totalorder %s95, %s96
    %p107 = scmp.eq.s32.totalorder %s17, 0
    %p108 = por %p106, %p107
    %p109 = scmp.ne.s32.totalorder %s95, %s96
    %p110 = scmp.eq.s32.totalorder %s18, 1
    %p111 = por %p109, %p110
    %p113 = scmp.ne.s32.totalorder %s96, %s112
    %p114 = scmp.eq.s32.totalorder %s18, 0
    %p115 = por %p113, %p114
    %s116 = ssub.s32 %s19, %s31
    %s117 = ssub.s32 %s20, %s27
    %s118 = sor.u32 %s116, %s117
    %p119 = scmp.eq.s32.totalorder %s118, 0
    %s121 = sadd.s32 %s120, 1
    %s122 = scalar_select %p119, %s120, %s121
    %p125 = pneg %p119
    %p126 = scmp.eq.s32.totalorder %s12, 1
    %p127 = por %p125, %p126
    %p128 = scmp.ne.s32.totalorder %s120, %s123
    %p129 = scmp.eq.s32.totalorder %s12, 0
    %p130 = por %p128, %p129
    %p131 = scmp.ne.s32.totalorder %s120, %s123
    %p132 = scmp.eq.s32.totalorder %s17, 1
    %p133 = por %p131, %p132
    %p134 = scmp.ne.s32.totalorder %s123, %s124
    %p135 = scmp.eq.s32.totalorder %s17, 0
    %p136 = por %p134, %p135
    %p137 = scmp.ne.s32.totalorder %s123, %s124
    %p138 = scmp.eq.s32.totalorder %s18, 1
    %p139 = por %p137, %p138
    %p141 = scmp.ne.s32.totalorder %s124, %s140
    %p142 = scmp.eq.s32.totalorder %s18, 0
    %p143 = por %p141, %p142
    %s145 = sadd.s32 %s144, 1
    %p148 = scmp.eq.s32.totalorder %s12, 1
    %p149 = scmp.ne.s32.totalorder %s144, %s146
    %p150 = scmp.eq.s32.totalorder %s12, 0
    %p151 = por %p149, %p150
    %p152 = scmp.ne.s32.totalorder %s144, %s146
    %p153 = scmp.eq.s32.totalorder %s17, 1
    %p154 = por %p152, %p153
    %p155 = scmp.ne.s32.totalorder %s146, %s147
    %p156 = scmp.eq.s32.totalorder %s17, 0
    %p157 = por %p155, %p156
    %p158 = scmp.ne.s32.totalorder %s146, %s147
    %p159 = scmp.eq.s32.totalorder %s18, 1
    %p160 = por %p158, %p159
    %p162 = scmp.ne.s32.totalorder %s147, %s161
    %p163 = scmp.eq.s32.totalorder %s18, 0
    %p164 = por %p162, %p163
    %s166 = sadd.s32 %s165, 1
    %p169 = scmp.eq.s32.totalorder %s12, 1
    %p170 = scmp.ne.s32.totalorder %s165, %s167
    %p171 = scmp.eq.s32.totalorder %s12, 0
    %p172 = por %p170, %p171
    %p173 = scmp.ne.s32.totalorder %s165, %s167
    %p174 = scmp.eq.s32.totalorder %s17, 1
    %p175 = por %p173, %p174
    %p176 = scmp.ne.s32.totalorder %s167, %s168
    %p177 = scmp.eq.s32.totalorder %s17, 0
    %p178 = por %p176, %p177
    %p179 = scmp.ne.s32.totalorder %s167, %s168
    %p180 = scmp.eq.s32.totalorder %s18, 1
    %p181 = por %p179, %p180
    %p183 = scmp.ne.s32.totalorder %s168, %s182
    %p184 = scmp.eq.s32.totalorder %s18, 0
    %p185 = por %p183, %p184
    %s186 = ssub.s32 %s19, %s31
    %s187 = ssub.s32 %s20, %s27
    %s188 = sor.u32 %s186, %s187
    %p189 = scmp.eq.s32.totalorder %s188, 0
    %s191 = sadd.s32 %s190, 1
    %s192 = scalar_select %p189, %s190, %s191
    %p195 = pneg %p189
    %p196 = scmp.eq.s32.totalorder %s12, 1
    %p197 = por %p195, %p196
    %p198 = scmp.ne.s32.totalorder %s190, %s193
    %p199 = scmp.eq.s32.totalorder %s12, 0
    %p200 = por %p198, %p199
    %p201 = scmp.ne.s32.totalorder %s190, %s193
    %p202 = scmp.eq.s32.totalorder %s17, 1
    %p203 = por %p201, %p202
    %p204 = scmp.ne.s32.totalorder %s193, %s194
    %p205 = scmp.eq.s32.totalorder %s17, 0
    %p206 = por %p204, %p205
    %p207 = scmp.ne.s32.totalorder %s193, %s194
    %p208 = scmp.eq.s32.totalorder %s18, 1
    %p209 = por %p207, %p208
    %p211 = scmp.ne.s32.totalorder %s194, %s210
    %p212 = scmp.eq.s32.totalorder %s18, 0
    %p213 = por %p211, %p212
    %p214 = scmp.le.s32.totalorder 1, %s12
    %p215 = scmp.lt.s32.totalorder %s12, 3
    %p216 = pnand %p214, %p215
    %p217 = pneg %p216
    // Predicated region
    $region9: #{channel_attention_forward.13} parent=5 // pred_check
      _
    $region10: #{channel_attention_forward.13} parent=5 // pred_check_branch
      %219 = sbr.rel (%p216) target = $region12
    $region11: #{channel_attention_forward.13} parent=5 // pred_region
      %s220 = ssub.s32 %s12, 1
      // Predicated region
      $region13: #{channel_attention_forward.13} parent=11 // pred_check
        %p221 = pneg %p157
      $region14: #{channel_attention_forward.13} parent=11 // pred_check_branch
        %223 = sbr.rel (%p221) target = $region16
      $region15: #{channel_attention_forward.13} parent=11 // pred_region
        _
      $region16: #{channel_attention_forward.13} parent=11 // pred_fallthru
        _
      // Predicated region
      $region17: #{channel_attention_forward.13} parent=11 // pred_check
        %p224 = pneg %p178
      $region18: #{channel_attention_forward.13} parent=11 // pred_check_branch
        %226 = sbr.rel (%p224) target = $region20
      $region19: #{channel_attention_forward.13} parent=11 // pred_region
        _
      $region20: #{channel_attention_forward.13} parent=11 // pred_fallthru
        _
    $region12: #{channel_attention_forward.13} parent=5 // pred_fallthru
      _
    %p227 = scmp.lt.s32.totalorder %s12, 2
    // Predicated region
    $region21: #{channel_attention_forward.13} parent=5 // pred_check
      %p228 = pneg %p227
    $region22: #{channel_attention_forward.13} parent=5 // pred_check_branch
      %230 = sbr.rel (%p228) target = $region24
    $region23: #{channel_attention_forward.13} parent=5 // pred_region
      // Predicated region
      $region25: #{channel_attention_forward.13} parent=23 // pred_check
        %p231 = pneg %p46
      $region26: #{channel_attention_forward.13} parent=23 // pred_check_branch
        %233 = sbr.rel (%p231) target = $region28
      $region27: #{channel_attention_forward.13} parent=23 // pred_region
        %p234 = scmp.lt.s32.totalorder %s19, 1
        %s235 = scalar_select %p234, %s19, 1
        %p236 = scmp.lt.s32.totalorder %s20, 0
        %s237 = scalar_select %p236, %s20, 0
        %s238 = sadd.s32 %s237, %s235
        %s239 = smul.addr %s238, 4
        %s240 = scalar_lea.vmem %s0, %s239
      $region28: #{channel_attention_forward.13} parent=23 // pred_fallthru
        _
      // Predicated region
      $region29: #{channel_attention_forward.13} parent=23 // pred_check
        %p241 = pneg %p74
      $region30: #{channel_attention_forward.13} parent=23 // pred_check_branch
        %243 = sbr.rel (%p241) target = $region32
      $region31: #{channel_attention_forward.13} parent=23 // pred_region
        %p244 = scmp.lt.s32.totalorder %s19, 1
        %s245 = scalar_select %p244, %s19, 1
        %p246 = scmp.lt.s32.totalorder %s20, 0
        %s247 = scalar_select %p246, %s20, 0
        %s248 = sadd.s32 %s247, %s245
        %s249 = smul.addr %s248, 4
        %s250 = scalar_lea.vmem %s1, %s249
      $region32: #{channel_attention_forward.13} parent=23 // pred_fallthru
        _
      // Predicated region
      $region33: #{channel_attention_forward.13} parent=23 // pred_check
        %p251 = pneg %p102
      $region34: #{channel_attention_forward.13} parent=23 // pred_check_branch
        %253 = sbr.rel (%p251) target = $region36
      $region35: #{channel_attention_forward.13} parent=23 // pred_region
        %p254 = scmp.lt.s32.totalorder %s19, 1
        %s255 = scalar_select %p254, %s19, 1
        %p256 = scmp.lt.s32.totalorder %s20, 0
        %s257 = scalar_select %p256, %s20, 0
        %s258 = sadd.s32 %s257, %s255
        %s259 = smul.addr %s258, 4
        %s260 = scalar_lea.vmem %s2, %s259
      $region36: #{channel_attention_forward.13} parent=23 // pred_fallthru
        _
      // Predicated region
      $region37: #{channel_attention_forward.13} parent=23 // pred_check
        %p261 = pneg %p130
      $region38: #{channel_attention_forward.13} parent=23 // pred_check_branch
        %263 = sbr.rel (%p261) target = $region40
      $region39: #{channel_attention_forward.13} parent=23 // pred_region
        %p264 = scmp.lt.s32.totalorder %s19, 1
        %s265 = scalar_select %p264, %s19, 1
        %p266 = scmp.lt.s32.totalorder %s20, 0
        %s267 = scalar_select %p266, %s20, 0
        %s268 = sadd.s32 %s267, %s265
        %s269 = smul.addr %s268, 4
        %s270 = scalar_lea.vmem %s3, %s269
      $region40: #{channel_attention_forward.13} parent=23 // pred_fallthru
        _
    $region24: #{channel_attention_forward.13} parent=5 // pred_fallthru
      _
    %p271 = scmp.le.s32.totalorder 1, %s12
    %p272 = scmp.lt.s32.totalorder %s12, 3
    %p273 = pnand %p271, %p272
    %p274 = pneg %p273
    // Predicated region
    $region41: #{channel_attention_forward.13} parent=5 // pred_check
      _
    $region42: #{channel_attention_forward.13} parent=5 // pred_check_branch
      %276 = sbr.rel (%p273) target = $region44
    $region43: #{channel_attention_forward.13} parent=5 // pred_region
      %s277 = ssub.s32 %s12, 1
      %p278 = scmp.lt.s32.totalorder %s21, 1
      %s279 = scalar_select %p278, %s21, 1
      %p280 = scmp.lt.s32.totalorder %s22, 0
      %s281 = scalar_select %p280, %s22, 0
      %s282 = sadd.s32 %s281, %s279
      %s283 = smul.addr %s282, 4
      %s284 = scalar_lea.vmem %s0, %s283
      %p285 = pneg %p52
      %p286 = pneg %p49
      %p287 = scmp.lt.s32.totalorder %s21, 1
      %s288 = scalar_select %p287, %s21, 1
      %p289 = scmp.lt.s32.totalorder %s22, 0
      %s290 = scalar_select %p289, %s22, 0
      %s291 = sadd.s32 %s290, %s288
      %s292 = smul.addr %s291, 4
      %s293 = scalar_lea.vmem %s1, %s292
      %p294 = pneg %p80
      %p295 = pneg %p77
      %p296 = scmp.lt.s32.totalorder %s21, 1
      %s297 = scalar_select %p296, %s21, 1
      %p298 = scmp.lt.s32.totalorder %s22, 0
      %s299 = scalar_select %p298, %s22, 0
      %s300 = sadd.s32 %s299, %s297
      %s301 = smul.addr %s300, 4
      %s302 = scalar_lea.vmem %s2, %s301
      %p303 = pneg %p108
      %p304 = pneg %p105
      %p305 = scmp.lt.s32.totalorder %s21, 1
      %s306 = scalar_select %p305, %s21, 1
      %p307 = scmp.lt.s32.totalorder %s22, 0
      %s308 = scalar_select %p307, %s22, 0
      %s309 = sadd.s32 %s308, %s306
      %s310 = smul.addr %s309, 4
      %s311 = scalar_lea.vmem %s3, %s310
      %p312 = pneg %p136
      %p313 = pneg %p133
      %p314 = pneg %p157
      %p315 = pneg %p154
      %p316 = pneg %p178
      %p317 = pneg %p175
      %p318 = pneg %p206
      %p319 = pneg %p203
      %p320 = scmp.lt.s32.totalorder %s21, 1
      %s321 = scalar_select %p320, %s21, 1
      %p322 = scmp.lt.s32.totalorder %s22, 0
      %s323 = scalar_select %p322, %s22, 0
      %s324 = sadd.s32 %s323, %s321
      %s325 = smul.addr %s324, 4
      %s326 = scalar_lea.vmem %s6, %s325
      %p327 = scmp.lt.s32.totalorder %s21, 1
      %s328 = scalar_select %p327, %s21, 1
      %p329 = scmp.lt.s32.totalorder %s22, 0
      %s330 = scalar_select %p329, %s22, 0
      %s331 = sadd.s32 %s330, %s328
      %s332 = smul.addr %s331, 4
      %s333 = scalar_lea.vmem %s0, %s332
      %p334 = scmp.lt.s32.totalorder %s21, 1
      %s335 = scalar_select %p334, %s21, 1
      %p336 = scmp.lt.s32.totalorder %s22, 0
      %s337 = scalar_select %p336, %s22, 0
      %s338 = sadd.s32 %s337, %s335
      %s339 = smul.addr %s338, 4
      %s340 = scalar_lea.vmem %s1, %s339
      %p341 = scmp.lt.s32.totalorder %s21, 1
      %s342 = scalar_select %p341, %s21, 1
      %p343 = scmp.lt.s32.totalorder %s22, 0
      %s344 = scalar_select %p343, %s22, 0
      %s345 = sadd.s32 %s344, %s342
      %s346 = smul.addr %s345, 4
      %s347 = scalar_lea.vmem %s2, %s346
      %p348 = scmp.lt.s32.totalorder %s21, 1
      %s349 = scalar_select %p348, %s21, 1
      %p350 = scmp.lt.s32.totalorder %s22, 0
      %s351 = scalar_select %p350, %s22, 0
      %s352 = sadd.s32 %s351, %s349
      %s353 = smul.addr %s352, 4
      %s354 = scalar_lea.vmem %s3, %s353
      %p355 = scmp.lt.s32.totalorder %s21, 1
      %s356 = scalar_select %p355, %s21, 1
      %p357 = scmp.lt.s32.totalorder %s22, 0
      %s358 = scalar_select %p357, %s22, 0
      %s359 = sadd.s32 %s358, %s356
      %s360 = smul.addr %s359, 4
      %s361 = scalar_lea.vmem %s6, %s360
      %v362 = vld [vmem:[%s4] sm:$0xf]
      %v363 = vld [vmem:[%s333] sm:$0xf]
      %365 = vset.pattern.permute.xlu0 0
      %366 = vperm.xlu0 %365, %v362
      %v367 = vpop.permute.xlu0 %366
      %v369 = vmul.f32 %v363, %v367
      %v370 = vld [vmem:[%s340] sm:$0xf]
      %371 = vset.pattern.permute.xlu0 1
      %372 = vperm.xlu0 %371, %v362
      %v373 = vpop.permute.xlu0 %372
      %v375 = vmul.f32 %v370, %v373
      %v376 = vadd.f32 %v369, %v375
      %v377 = vld [vmem:[%s347] sm:$0xf]
      %378 = vset.pattern.permute.xlu0 2
      %379 = vperm.xlu0 %378, %v362
      %v380 = vpop.permute.xlu0 %379
      %v382 = vmul.f32 %v377, %v380
      %v383 = vadd.f32 %v376, %v382
      %v384 = vld [vmem:[%s354] sm:$0xf]
      %385 = vset.pattern.permute.xlu0 3
      %386 = vperm.xlu0 %385, %v362
      %v387 = vpop.permute.xlu0 %386
      %v389 = vmul.f32 %v384, %v387
      %v390 = vadd.f32 %v383, %v389
      %v391 = vld [vmem:[%s5] sm:$0xf]
      %393 = vset.pattern.permute.xlu0 0
      %394 = vperm.xlu0 %393, %v391
      %v395 = vpop.permute.xlu0 %394
      %v397 = vadd.f32 %v390, %v395
      %vm398 = vcmask 519168
      %399 = vst.msk [vmem:[%s361] sm:$0xf] %vm398, %v397
      %p400 = scmp.lt.s32.totalorder %s21, 1
      %s401 = scalar_select %p400, %s21, 1
      %p402 = scmp.lt.s32.totalorder %s22, 0
      %s403 = scalar_select %p402, %s22, 0
      %s404 = sadd.s32 %s403, %s401
      %s405 = smul.addr %s404, 4
      %s406 = scalar_lea.vmem %s6, %s405
      // Predicated region
      $region45: #{channel_attention_forward.13} parent=43 // pred_check
        %p407 = pneg %p203
      $region46: #{channel_attention_forward.13} parent=43 // pred_check_branch
        %409 = sbr.rel (%p407) target = $region48
      $region47: #{channel_attention_forward.13} parent=43 // pred_region
        _
      $region48: #{channel_attention_forward.13} parent=43 // pred_fallthru
        _
    $region44: #{channel_attention_forward.13} parent=5 // pred_fallthru
      _
    %p410 = scmp.le.s32.totalorder 2, %s12
    // Predicated region
    $region49: #{channel_attention_forward.13} parent=5 // pred_check
      %p411 = pneg %p410
    $region50: #{channel_attention_forward.13} parent=5 // pred_check_branch
      %413 = sbr.rel (%p411) target = $region52
    $region51: #{channel_attention_forward.13} parent=5 // pred_region
      %s414 = ssub.s32 %s12, 2
      // Predicated region
      $region53: #{channel_attention_forward.13} parent=51 // pred_check
        %p415 = pneg %p209
      $region54: #{channel_attention_forward.13} parent=51 // pred_check_branch
        %417 = sbr.rel (%p415) target = $region56
      $region55: #{channel_attention_forward.13} parent=51 // pred_region
        %p418 = scmp.lt.s32.totalorder %s23, 1
        %s419 = scalar_select %p418, %s23, 1
        %p420 = scmp.lt.s32.totalorder %s24, 0
        %s421 = scalar_select %p420, %s24, 0
        %s422 = sadd.s32 %s421, %s419
        %s423 = smul.addr %s422, 4
        %s424 = scalar_lea.vmem %s6, %s423
      $region56: #{channel_attention_forward.13} parent=51 // pred_fallthru
        _
    $region52: #{channel_attention_forward.13} parent=5 // pred_fallthru
      _
  $region6: #{channel_attention_forward.13} parent=0 // loop_footer
    %s16 = sadd.s32 1, %s12
  $region7: #{channel_attention_forward.13} parent=0 // loop_footer_branch
    %11 = sbr.rel target = $region3
  $region8: #{channel_attention_forward.13} parent=0 // loop_exit
    _

// kernel: channel_attention_forward.14
$region0: #{channel_attention_forward.14}
  #allocation0 [shape = 'u32[]', space=smem, size = 0x4, offset = 0x4, fixed_abs, tag = 'smem constant byte address 0x4 - core index']
  #allocation1 [shape = 'u32[144,128]{1,0:T(1,128)}', space=vmem, size = 0x12000, scoped, tag = 'internal scratch']
  %s0 = inlined_call_operand.vmem [shape: f32[2,4,16], index: 0, kind: input, shape index: {}]
  %s1 = inlined_call_operand.vmem [shape: f32[2,4,16], index: 1, kind: input, shape index: {}]
  %s2 = inlined_call_operand.vmem [shape: f32[2,4,16], index: 2, kind: input, shape index: {}]
  %s3 = inlined_call_operand.vmem [shape: f32[2,4,16], index: 3, kind: input, shape index: {}]
  %s4 = inlined_call_operand.vmem [shape: f32[1,4,4], index: 4, kind: input, shape index: {}]
  %s5 = inlined_call_operand.vmem [shape: f32[1,4,1], index: 5, kind: input, shape index: {}]
  %s6 = inlined_call_operand.vmem [shape: f32[2,4,16], index: 6, kind: output, shape index: {}]
  %s7 = sld [smem:[#allocation0]]
  $region57: #{channel_attention_forward.14} parent=0
    _
  %s9 = ssub.s32 1, %s7
  %s10 = scalar_select 0, %s9, %s7
  loop: start=0, step=1, limit=4
  $region2: #{channel_attention_forward.14} parent=0 // loop_pre_header
    _
  $region3: #{channel_attention_forward.14} parent=0 // loop_header
    %s12 = sphi 0, %s16
    %p13 = scmp.ge.s32.totalorder %s12, 4
    %s19 = sphi 0, %s31
    %s20 = sphi 0, %s27
    %s21 = sphi 0, %s19
    %s22 = sphi 0, %s20
    %s23 = sphi 0, %s21
    %s24 = sphi 0, %s22
    %s36 = sphi 0, %s38
    %s39 = sphi 0, %s36
    %s40 = sphi 0, %s39
    %s56 = sphi 0, %s40
    %s64 = sphi 0, %s66
    %s67 = sphi 0, %s64
    %s68 = sphi 0, %s67
    %s84 = sphi 0, %s68
    %s92 = sphi 0, %s94
    %s95 = sphi 0, %s92
    %s96 = sphi 0, %s95
    %s112 = sphi 0, %s96
    %s120 = sphi 0, %s122
    %s123 = sphi 0, %s120
    %s124 = sphi 0, %s123
    %s140 = sphi 0, %s124
    %s144 = sphi 0, %s144
    %s146 = sphi 0, %s144
    %s147 = sphi 0, %s146
    %s161 = sphi 0, %s147
    %s165 = sphi 0, %s165
    %s167 = sphi 0, %s165
    %s168 = sphi 0, %s167
    %s182 = sphi 0, %s168
    %s190 = sphi 0, %s192
    %s193 = sphi 0, %s190
    %s194 = sphi 0, %s193
    %s210 = sphi 0, %s194
  $region4: #{channel_attention_forward.14} parent=0 // loop_header_branch
    %15 = sbr.rel (%p13) target = $region8
  $region5: #{channel_attention_forward.14} parent=0 // loop_body
    %s17 = ssub.s32 %s12, 1
    %s18 = ssub.s32 %s12, 2
    %s25 = sadd.s32 1, %s20
    %p26 = scmp.ge.s32.totalorder %s25, 1
    %s27 = scalar_select %p26, 0, %s25
    %s28 = sadd.s32 1, %s19
    %s29 = scalar_select %p26, %s28, %s19
    %p30 = scmp.ge.s32.totalorder %s29, 2
    %s31 = scalar_select %p30, 0, %s29
    %s32 = ssub.s32 %s19, %s31
    %s33 = ssub.s32 %s20, %s27
    %s34 = sor.u32 %s32, %s33
    %p35 = scmp.eq.s32.totalorder %s34, 0
    %s37 = sadd.s32 %s36, 1
    %s38 = scalar_select %p35, %s36, %s37
    %p41 = pneg %p35
    %p42 = scmp.eq.s32.totalorder %s12, 1
    %p43 = por %p41, %p42
    %p44 = scmp.ne.s32.totalorder %s36, %s39
    %p45 = scmp.eq.s32.totalorder %s12, 0
    %p46 = por %p44, %p45
    %p47 = scmp.ne.s32.totalorder %s36, %s39
    %p48 = scmp.eq.s32.totalorder %s17, 1
    %p49 = por %p47, %p48
    %p50 = scmp.ne.s32.totalorder %s39, %s40
    %p51 = scmp.eq.s32.totalorder %s17, 0
    %p52 = por %p50, %p51
    %p53 = scmp.ne.s32.totalorder %s39, %s40
    %p54 = scmp.eq.s32.totalorder %s18, 1
    %p55 = por %p53, %p54
    %p57 = scmp.ne.s32.totalorder %s40, %s56
    %p58 = scmp.eq.s32.totalorder %s18, 0
    %p59 = por %p57, %p58
    %s60 = ssub.s32 %s19, %s31
    %s61 = ssub.s32 %s20, %s27
    %s62 = sor.u32 %s60, %s61
    %p63 = scmp.eq.s32.totalorder %s62, 0
    %s65 = sadd.s32 %s64, 1
    %s66 = scalar_select %p63, %s64, %s65
    %p69 = pneg %p63
    %p70 = scmp.eq.s32.totalorder %s12, 1
    %p71 = por %p69, %p70
    %p72 = scmp.ne.s32.totalorder %s64, %s67
    %p73 = scmp.eq.s32.totalorder %s12, 0
    %p74 = por %p72, %p73
    %p75 = scmp.ne.s32.totalorder %s64, %s67
    %p76 = scmp.eq.s32.totalorder %s17, 1
    %p77 = por %p75, %p76
    %p78 = scmp.ne.s32.totalorder %s67, %s68
    %p79 = scmp.eq.s32.totalorder %s17, 0
    %p80 = por %p78, %p79
    %p81 = scmp.ne.s32.totalorder %s67, %s68
    %p82 = scmp.eq.s32.totalorder %s18, 1
    %p83 = por %p81, %p82
    %p85 = scmp.ne.s32.totalorder %s68, %s84
    %p86 = scmp.eq.s32.totalorder %s18, 0
    %p87 = por %p85, %p86
    %s88 = ssub.s32 %s19, %s31
    %s89 = ssub.s32 %s20, %s27
    %s90 = sor.u32 %s88, %s89
    %p91 = scmp.eq.s32.totalorder %s90, 0
    %s93 = sadd.s32 %s92, 1
    %s94 = scalar_select %p91, %s92, %s93
    %p97 = pneg %p91
    %p98 = scmp.eq.s32.totalorder %s12, 1
    %p99 = por %p97, %p98
    %p100 = scmp.ne.s32.totalorder %s92, %s95
    %p101 = scmp.eq.s32.totalorder %s12, 0
    %p102 = por %p100, %p101
    %p103 = scmp.ne.s32.totalorder %s92, %s95
    %p104 = scmp.eq.s32.totalorder %s17, 1
    %p105 = por %p103, %p104
    %p106 = scmp.ne.s32.totalorder %s95, %s96
    %p107 = scmp.eq.s32.totalorder %s17, 0
    %p108 = por %p106, %p107
    %p109 = scmp.ne.s32.totalorder %s95, %s96
    %p110 = scmp.eq.s32.totalorder %s18, 1
    %p111 = por %p109, %p110
    %p113 = scmp.ne.s32.totalorder %s96, %s112
    %p114 = scmp.eq.s32.totalorder %s18, 0
    %p115 = por %p113, %p114
    %s116 = ssub.s32 %s19, %s31
    %s117 = ssub.s32 %s20, %s27
    %s118 = sor.u32 %s116, %s117
    %p119 = scmp.eq.s32.totalorder %s118, 0
    %s121 = sadd.s32 %s120, 1
    %s122 = scalar_select %p119, %s120, %s121
    %p125 = pneg %p119
    %p126 = scmp.eq.s32.totalorder %s12, 1
    %p127 = por %p125, %p126
    %p128 = scmp.ne.s32.totalorder %s120, %s123
    %p129 = scmp.eq.s32.totalorder %s12, 0
    %p130 = por %p128, %p129
    %p131 = scmp.ne.s32.totalorder %s120, %s123
    %p132 = scmp.eq.s32.totalorder %s17, 1
    %p133 = por %p131, %p132
    %p134 = scmp.ne.s32.totalorder %s123, %s124
    %p135 = scmp.eq.s32.totalorder %s17, 0
    %p136 = por %p134, %p135
    %p137 = scmp.ne.s32.totalorder %s123, %s124
    %p138 = scmp.eq.s32.totalorder %s18, 1
    %p139 = por %p137, %p138
    %p141 = scmp.ne.s32.totalorder %s124, %s140
    %p142 = scmp.eq.s32.totalorder %s18, 0
    %p143 = por %p141, %p142
    %s145 = sadd.s32 %s144, 1
    %p148 = scmp.eq.s32.totalorder %s12, 1
    %p149 = scmp.ne.s32.totalorder %s144, %s146
    %p150 = scmp.eq.s32.totalorder %s12, 0
    %p151 = por %p149, %p150
    %p152 = scmp.ne.s32.totalorder %s144, %s146
    %p153 = scmp.eq.s32.totalorder %s17, 1
    %p154 = por %p152, %p153
    %p155 = scmp.ne.s32.totalorder %s146, %s147
    %p156 = scmp.eq.s32.totalorder %s17, 0
    %p157 = por %p155, %p156
    %p158 = scmp.ne.s32.totalorder %s146, %s147
    %p159 = scmp.eq.s32.totalorder %s18, 1
    %p160 = por %p158, %p159
    %p162 = scmp.ne.s32.totalorder %s147, %s161
    %p163 = scmp.eq.s32.totalorder %s18, 0
    %p164 = por %p162, %p163
    %s166 = sadd.s32 %s165, 1
    %p169 = scmp.eq.s32.totalorder %s12, 1
    %p170 = scmp.ne.s32.totalorder %s165, %s167
    %p171 = scmp.eq.s32.totalorder %s12, 0
    %p172 = por %p170, %p171
    %p173 = scmp.ne.s32.totalorder %s165, %s167
    %p174 = scmp.eq.s32.totalorder %s17, 1
    %p175 = por %p173, %p174
    %p176 = scmp.ne.s32.totalorder %s167, %s168
    %p177 = scmp.eq.s32.totalorder %s17, 0
    %p178 = por %p176, %p177
    %p179 = scmp.ne.s32.totalorder %s167, %s168
    %p180 = scmp.eq.s32.totalorder %s18, 1
    %p181 = por %p179, %p180
    %p183 = scmp.ne.s32.totalorder %s168, %s182
    %p184 = scmp.eq.s32.totalorder %s18, 0
    %p185 = por %p183, %p184
    %s186 = ssub.s32 %s19, %s31
    %s187 = ssub.s32 %s20, %s27
    %s188 = sor.u32 %s186, %s187
    %p189 = scmp.eq.s32.totalorder %s188, 0
    %s191 = sadd.s32 %s190, 1
    %s192 = scalar_select %p189, %s190, %s191
    %p195 = pneg %p189
    %p196 = scmp.eq.s32.totalorder %s12, 1
    %p197 = por %p195, %p196
    %p198 = scmp.ne.s32.totalorder %s190, %s193
    %p199 = scmp.eq.s32.totalorder %s12, 0
    %p200 = por %p198, %p199
    %p201 = scmp.ne.s32.totalorder %s190, %s193
    %p202 = scmp.eq.s32.totalorder %s17, 1
    %p203 = por %p201, %p202
    %p204 = scmp.ne.s32.totalorder %s193, %s194
    %p205 = scmp.eq.s32.totalorder %s17, 0
    %p206 = por %p204, %p205
    %p207 = scmp.ne.s32.totalorder %s193, %s194
    %p208 = scmp.eq.s32.totalorder %s18, 1
    %p209 = por %p207, %p208
    %p211 = scmp.ne.s32.totalorder %s194, %s210
    %p212 = scmp.eq.s32.totalorder %s18, 0
    %p213 = por %p211, %p212
    %p214 = scmp.le.s32.totalorder 1, %s12
    %p215 = scmp.lt.s32.totalorder %s12, 3
    %p216 = pnand %p214, %p215
    %p217 = pneg %p216
    // Predicated region
    $region9: #{channel_attention_forward.14} parent=5 // pred_check
      _
    $region10: #{channel_attention_forward.14} parent=5 // pred_check_branch
      %219 = sbr.rel (%p216) target = $region12
    $region11: #{channel_attention_forward.14} parent=5 // pred_region
      %s220 = ssub.s32 %s12, 1
      // Predicated region
      $region13: #{channel_attention_forward.14} parent=11 // pred_check
        %p221 = pneg %p157
      $region14: #{channel_attention_forward.14} parent=11 // pred_check_branch
        %223 = sbr.rel (%p221) target = $region16
      $region15: #{channel_attention_forward.14} parent=11 // pred_region
        _
      $region16: #{channel_attention_forward.14} parent=11 // pred_fallthru
        _
      // Predicated region
      $region17: #{channel_attention_forward.14} parent=11 // pred_check
        %p224 = pneg %p178
      $region18: #{channel_attention_forward.14} parent=11 // pred_check_branch
        %226 = sbr.rel (%p224) target = $region20
      $region19: #{channel_attention_forward.14} parent=11 // pred_region
        _
      $region20: #{channel_attention_forward.14} parent=11 // pred_fallthru
        _
    $region12: #{channel_attention_forward.14} parent=5 // pred_fallthru
      _
    %p227 = scmp.lt.s32.totalorder %s12, 2
    // Predicated region
    $region21: #{channel_attention_forward.14} parent=5 // pred_check
      %p228 = pneg %p227
    $region22: #{channel_attention_forward.14} parent=5 // pred_check_branch
      %230 = sbr.rel (%p228) target = $region24
    $region23: #{channel_attention_forward.14} parent=5 // pred_region
      // Predicated region
      $region25: #{channel_attention_forward.14} parent=23 // pred_check
        %p231 = pneg %p46
      $region26: #{channel_attention_forward.14} parent=23 // pred_check_branch
        %233 = sbr.rel (%p231) target = $region28
      $region27: #{channel_attention_forward.14} parent=23 // pred_region
        %p234 = scmp.lt.s32.totalorder %s19, 1
        %s235 = scalar_select %p234, %s19, 1
        %p236 = scmp.lt.s32.totalorder %s20, 0
        %s237 = scalar_select %p236, %s20, 0
        %s238 = sadd.s32 %s237, %s235
        %s239 = smul.addr %s238, 4
        %s240 = scalar_lea.vmem %s0, %s239
      $region28: #{channel_attention_forward.14} parent=23 // pred_fallthru
        _
      // Predicated region
      $region29: #{channel_attention_forward.14} parent=23 // pred_check
        %p241 = pneg %p74
      $region30: #{channel_attention_forward.14} parent=23 // pred_check_branch
        %243 = sbr.rel (%p241) target = $region32
      $region31: #{channel_attention_forward.14} parent=23 // pred_region
        %p244 = scmp.lt.s32.totalorder %s19, 1
        %s245 = scalar_select %p244, %s19, 1
        %p246 = scmp.lt.s32.totalorder %s20, 0
        %s247 = scalar_select %p246, %s20, 0
        %s248 = sadd.s32 %s247, %s245
        %s249 = smul.addr %s248, 4
        %s250 = scalar_lea.vmem %s1, %s249
      $region32: #{channel_attention_forward.14} parent=23 // pred_fallthru
        _
      // Predicated region
      $region33: #{channel_attention_forward.14} parent=23 // pred_check
        %p251 = pneg %p102
      $region34: #{channel_attention_forward.14} parent=23 // pred_check_branch
        %253 = sbr.rel (%p251) target = $region36
      $region35: #{channel_attention_forward.14} parent=23 // pred_region
        %p254 = scmp.lt.s32.totalorder %s19, 1
        %s255 = scalar_select %p254, %s19, 1
        %p256 = scmp.lt.s32.totalorder %s20, 0
        %s257 = scalar_select %p256, %s20, 0
        %s258 = sadd.s32 %s257, %s255
        %s259 = smul.addr %s258, 4
        %s260 = scalar_lea.vmem %s2, %s259
      $region36: #{channel_attention_forward.14} parent=23 // pred_fallthru
        _
      // Predicated region
      $region37: #{channel_attention_forward.14} parent=23 // pred_check
        %p261 = pneg %p130
      $region38: #{channel_attention_forward.14} parent=23 // pred_check_branch
        %263 = sbr.rel (%p261) target = $region40
      $region39: #{channel_attention_forward.14} parent=23 // pred_region
        %p264 = scmp.lt.s32.totalorder %s19, 1
        %s265 = scalar_select %p264, %s19, 1
        %p266 = scmp.lt.s32.totalorder %s20, 0
        %s267 = scalar_select %p266, %s20, 0
        %s268 = sadd.s32 %s267, %s265
        %s269 = smul.addr %s268, 4
        %s270 = scalar_lea.vmem %s3, %s269
      $region40: #{channel_attention_forward.14} parent=23 // pred_fallthru
        _
    $region24: #{channel_attention_forward.14} parent=5 // pred_fallthru
      _
    %p271 = scmp.le.s32.totalorder 1, %s12
    %p272 = scmp.lt.s32.totalorder %s12, 3
    %p273 = pnand %p271, %p272
    %p274 = pneg %p273
    // Predicated region
    $region41: #{channel_attention_forward.14} parent=5 // pred_check
      _
    $region42: #{channel_attention_forward.14} parent=5 // pred_check_branch
      %276 = sbr.rel (%p273) target = $region44
    $region43: #{channel_attention_forward.14} parent=5 // pred_region
      %s277 = ssub.s32 %s12, 1
      %p278 = scmp.lt.s32.totalorder %s21, 1
      %s279 = scalar_select %p278, %s21, 1
      %p280 = scmp.lt.s32.totalorder %s22, 0
      %s281 = scalar_select %p280, %s22, 0
      %s282 = sadd.s32 %s281, %s279
      %s283 = smul.addr %s282, 4
      %s284 = scalar_lea.vmem %s0, %s283
      %p285 = pneg %p52
      %p286 = pneg %p49
      %p287 = scmp.lt.s32.totalorder %s21, 1
      %s288 = scalar_select %p287, %s21, 1
      %p289 = scmp.lt.s32.totalorder %s22, 0
      %s290 = scalar_select %p289, %s22, 0
      %s291 = sadd.s32 %s290, %s288
      %s292 = smul.addr %s291, 4
      %s293 = scalar_lea.vmem %s1, %s292
      %p294 = pneg %p80
      %p295 = pneg %p77
      %p296 = scmp.lt.s32.totalorder %s21, 1
      %s297 = scalar_select %p296, %s21, 1
      %p298 = scmp.lt.s32.totalorder %s22, 0
      %s299 = scalar_select %p298, %s22, 0
      %s300 = sadd.s32 %s299, %s297
      %s301 = smul.addr %s300, 4
      %s302 = scalar_lea.vmem %s2, %s301
      %p303 = pneg %p108
      %p304 = pneg %p105
      %p305 = scmp.lt.s32.totalorder %s21, 1
      %s306 = scalar_select %p305, %s21, 1
      %p307 = scmp.lt.s32.totalorder %s22, 0
      %s308 = scalar_select %p307, %s22, 0
      %s309 = sadd.s32 %s308, %s306
      %s310 = smul.addr %s309, 4
      %s311 = scalar_lea.vmem %s3, %s310
      %p312 = pneg %p136
      %p313 = pneg %p133
      %p314 = pneg %p157
      %p315 = pneg %p154
      %p316 = pneg %p178
      %p317 = pneg %p175
      %p318 = pneg %p206
      %p319 = pneg %p203
      %p320 = scmp.lt.s32.totalorder %s21, 1
      %s321 = scalar_select %p320, %s21, 1
      %p322 = scmp.lt.s32.totalorder %s22, 0
      %s323 = scalar_select %p322, %s22, 0
      %s324 = sadd.s32 %s323, %s321
      %s325 = smul.addr %s324, 4
      %s326 = scalar_lea.vmem %s6, %s325
      %p327 = scmp.lt.s32.totalorder %s21, 1
      %s328 = scalar_select %p327, %s21, 1
      %p329 = scmp.lt.s32.totalorder %s22, 0
      %s330 = scalar_select %p329, %s22, 0
      %s331 = sadd.s32 %s330, %s328
      %s332 = smul.addr %s331, 4
      %s333 = scalar_lea.vmem %s0, %s332
      %p334 = scmp.lt.s32.totalorder %s21, 1
      %s335 = scalar_select %p334, %s21, 1
      %p336 = scmp.lt.s32.totalorder %s22, 0
      %s337 = scalar_select %p336, %s22, 0
      %s338 = sadd.s32 %s337, %s335
      %s339 = smul.addr %s338, 4
      %s340 = scalar_lea.vmem %s1, %s339
      %p341 = scmp.lt.s32.totalorder %s21, 1
      %s342 = scalar_select %p341, %s21, 1
      %p343 = scmp.lt.s32.totalorder %s22, 0
      %s344 = scalar_select %p343, %s22, 0
      %s345 = sadd.s32 %s344, %s342
      %s346 = smul.addr %s345, 4
      %s347 = scalar_lea.vmem %s2, %s346
      %p348 = scmp.lt.s32.totalorder %s21, 1
      %s349 = scalar_select %p348, %s21, 1
      %p350 = scmp.lt.s32.totalorder %s22, 0
      %s351 = scalar_select %p350, %s22, 0
      %s352 = sadd.s32 %s351, %s349
      %s353 = smul.addr %s352, 4
      %s354 = scalar_lea.vmem %s3, %s353
      %p355 = scmp.lt.s32.totalorder %s21, 1
      %s356 = scalar_select %p355, %s21, 1
      %p357 = scmp.lt.s32.totalorder %s22, 0
      %s358 = scalar_select %p357, %s22, 0
      %s359 = sadd.s32 %s358, %s356
      %s360 = smul.addr %s359, 4
      %s361 = scalar_lea.vmem %s6, %s360
      %v362 = vld [vmem:[%s4] sm:$0xf]
      %v363 = vld [vmem:[%s333] sm:$0xf]
      %365 = vset.pattern.permute.xlu0 0
      %366 = vperm.xlu0 %365, %v362
      %v367 = vpop.permute.xlu0 %366
      %v369 = vmul.f32 %v363, %v367
      %v370 = vld [vmem:[%s340] sm:$0xf]
      %371 = vset.pattern.permute.xlu0 1
      %372 = vperm.xlu0 %371, %v362
      %v373 = vpop.permute.xlu0 %372
      %v375 = vmul.f32 %v370, %v373
      %v376 = vadd.f32 %v369, %v375
      %v377 = vld [vmem:[%s347] sm:$0xf]
      %378 = vset.pattern.permute.xlu0 2
      %379 = vperm.xlu0 %378, %v362
      %v380 = vpop.permute.xlu0 %379
      %v382 = vmul.f32 %v377, %v380
      %v383 = vadd.f32 %v376, %v382
      %v384 = vld [vmem:[%s354] sm:$0xf]
      %385 = vset.pattern.permute.xlu0 3
      %386 = vperm.xlu0 %385, %v362
      %v387 = vpop.permute.xlu0 %386
      %v389 = vmul.f32 %v384, %v387
      %v390 = vadd.f32 %v383, %v389
      %v391 = vld [vmem:[%s5] sm:$0xf]
      %393 = vset.pattern.permute.xlu0 0
      %394 = vperm.xlu0 %393, %v391
      %v395 = vpop.permute.xlu0 %394
      %v397 = vadd.f32 %v390, %v395
      %vm398 = vcmask 125952
      %399 = vst.msk [vmem:[%s361] sm:$0xf] %vm398, %v397
      %p400 = scmp.lt.s32.totalorder %s21, 1
      %s401 = scalar_select %p400, %s21, 1
      %p402 = scmp.lt.s32.totalorder %s22, 0
      %s403 = scalar_select %p402, %s22, 0
      %s404 = sadd.s32 %s403, %s401
      %s405 = smul.addr %s404, 4
      %s406 = scalar_lea.vmem %s6, %s405
      // Predicated region
      $region45: #{channel_attention_forward.14} parent=43 // pred_check
        %p407 = pneg %p203
      $region46: #{channel_attention_forward.14} parent=43 // pred_check_branch
        %409 = sbr.rel (%p407) target = $region48
      $region47: #{channel_attention_forward.14} parent=43 // pred_region
        _
      $region48: #{channel_attention_forward.14} parent=43 // pred_fallthru
        _
    $region44: #{channel_attention_forward.14} parent=5 // pred_fallthru
      _
    %p410 = scmp.le.s32.totalorder 2, %s12
    // Predicated region
    $region49: #{channel_attention_forward.14} parent=5 // pred_check
      %p411 = pneg %p410
    $region50: #{channel_attention_forward.14} parent=5 // pred_check_branch
      %413 = sbr.rel (%p411) target = $region52
    $region51: #{channel_attention_forward.14} parent=5 // pred_region
      %s414 = ssub.s32 %s12, 2
      // Predicated region
      $region53: #{channel_attention_forward.14} parent=51 // pred_check
        %p415 = pneg %p209
      $region54: #{channel_attention_forward.14} parent=51 // pred_check_branch
        %417 = sbr.rel (%p415) target = $region56
      $region55: #{channel_attention_forward.14} parent=51 // pred_region
        %p418 = scmp.lt.s32.totalorder %s23, 1
        %s419 = scalar_select %p418, %s23, 1
        %p420 = scmp.lt.s32.totalorder %s24, 0
        %s421 = scalar_select %p420, %s24, 0
        %s422 = sadd.s32 %s421, %s419
        %s423 = smul.addr %s422, 4
        %s424 = scalar_lea.vmem %s6, %s423
      $region56: #{channel_attention_forward.14} parent=51 // pred_fallthru
        _
    $region52: #{channel_attention_forward.14} parent=5 // pred_fallthru
      _
  $region6: #{channel_attention_forward.14} parent=0 // loop_footer
    %s16 = sadd.s32 1, %s12
  $region7: #{channel_attention_forward.14} parent=0 // loop_footer_branch
    %11 = sbr.rel target = $region3
  $region8: #{channel_attention_forward.14} parent=0 // loop_exit
    _

// kernel: channel_attention_forward.16
$region0: #{channel_attention_forward.16}
  #allocation0 [shape = 'u32[]', space=smem, size = 0x4, offset = 0x4, fixed_abs, tag = 'smem constant byte address 0x4 - core index']
  #allocation1 [shape = 'u32[144,128]{1,0:T(1,128)}', space=vmem, size = 0x12000, scoped, tag = 'internal scratch']
  %s0 = inlined_call_operand.vmem [shape: f32[2,4,1], index: 0, kind: input, shape index: {}]
  %s1 = inlined_call_operand.vmem [shape: f32[2,4,1], index: 1, kind: input, shape index: {}]
  %s2 = inlined_call_operand.vmem [shape: f32[2,4,1], index: 2, kind: input, shape index: {}]
  %s3 = inlined_call_operand.vmem [shape: f32[2,4,1], index: 3, kind: input, shape index: {}]
  %s4 = inlined_call_operand.vmem [shape: f32[1,4,4], index: 4, kind: input, shape index: {}]
  %s5 = inlined_call_operand.vmem [shape: f32[1,4,1], index: 5, kind: input, shape index: {}]
  %s6 = inlined_call_operand.vmem [shape: f32[2,4,1], index: 6, kind: output, shape index: {}]
  %s7 = sld [smem:[#allocation0]]
  $region57: #{channel_attention_forward.16} parent=0
    _
  %s9 = ssub.s32 1, %s7
  %s10 = scalar_select 0, %s9, %s7
  loop: start=0, step=1, limit=4
  $region2: #{channel_attention_forward.16} parent=0 // loop_pre_header
    _
  $region3: #{channel_attention_forward.16} parent=0 // loop_header
    %s12 = sphi 0, %s16
    %p13 = scmp.ge.s32.totalorder %s12, 4
    %s19 = sphi 0, %s31
    %s20 = sphi 0, %s27
    %s21 = sphi 0, %s19
    %s22 = sphi 0, %s20
    %s23 = sphi 0, %s21
    %s24 = sphi 0, %s22
    %s36 = sphi 0, %s38
    %s39 = sphi 0, %s36
    %s40 = sphi 0, %s39
    %s56 = sphi 0, %s40
    %s64 = sphi 0, %s66
    %s67 = sphi 0, %s64
    %s68 = sphi 0, %s67
    %s84 = sphi 0, %s68
    %s92 = sphi 0, %s94
    %s95 = sphi 0, %s92
    %s96 = sphi 0, %s95
    %s112 = sphi 0, %s96
    %s120 = sphi 0, %s122
    %s123 = sphi 0, %s120
    %s124 = sphi 0, %s123
    %s140 = sphi 0, %s124
    %s144 = sphi 0, %s144
    %s146 = sphi 0, %s144
    %s147 = sphi 0, %s146
    %s161 = sphi 0, %s147
    %s165 = sphi 0, %s165
    %s167 = sphi 0, %s165
    %s168 = sphi 0, %s167
    %s182 = sphi 0, %s168
    %s190 = sphi 0, %s192
    %s193 = sphi 0, %s190
    %s194 = sphi 0, %s193
    %s210 = sphi 0, %s194
  $region4: #{channel_attention_forward.16} parent=0 // loop_header_branch
    %15 = sbr.rel (%p13) target = $region8
  $region5: #{channel_attention_forward.16} parent=0 // loop_body
    %s17 = ssub.s32 %s12, 1
    %s18 = ssub.s32 %s12, 2
    %s25 = sadd.s32 1, %s20
    %p26 = scmp.ge.s32.totalorder %s25, 1
    %s27 = scalar_select %p26, 0, %s25
    %s28 = sadd.s32 1, %s19
    %s29 = scalar_select %p26, %s28, %s19
    %p30 = scmp.ge.s32.totalorder %s29, 2
    %s31 = scalar_select %p30, 0, %s29
    %s32 = ssub.s32 %s19, %s31
    %s33 = ssub.s32 %s20, %s27
    %s34 = sor.u32 %s32, %s33
    %p35 = scmp.eq.s32.totalorder %s34, 0
    %s37 = sadd.s32 %s36, 1
    %s38 = scalar_select %p35, %s36, %s37
    %p41 = pneg %p35
    %p42 = scmp.eq.s32.totalorder %s12, 1
    %p43 = por %p41, %p42
    %p44 = scmp.ne.s32.totalorder %s36, %s39
    %p45 = scmp.eq.s32.totalorder %s12, 0
    %p46 = por %p44, %p45
    %p47 = scmp.ne.s32.totalorder %s36, %s39
    %p48 = scmp.eq.s32.totalorder %s17, 1
    %p49 = por %p47, %p48
    %p50 = scmp.ne.s32.totalorder %s39, %s40
    %p51 = scmp.eq.s32.totalorder %s17, 0
    %p52 = por %p50, %p51
    %p53 = scmp.ne.s32.totalorder %s39, %s40
    %p54 = scmp.eq.s32.totalorder %s18, 1
    %p55 = por %p53, %p54
    %p57 = scmp.ne.s32.totalorder %s40, %s56
    %p58 = scmp.eq.s32.totalorder %s18, 0
    %p59 = por %p57, %p58
    %s60 = ssub.s32 %s19, %s31
    %s61 = ssub.s32 %s20, %s27
    %s62 = sor.u32 %s60, %s61
    %p63 = scmp.eq.s32.totalorder %s62, 0
    %s65 = sadd.s32 %s64, 1
    %s66 = scalar_select %p63, %s64, %s65
    %p69 = pneg %p63
    %p70 = scmp.eq.s32.totalorder %s12, 1
    %p71 = por %p69, %p70
    %p72 = scmp.ne.s32.totalorder %s64, %s67
    %p73 = scmp.eq.s32.totalorder %s12, 0
    %p74 = por %p72, %p73
    %p75 = scmp.ne.s32.totalorder %s64, %s67
    %p76 = scmp.eq.s32.totalorder %s17, 1
    %p77 = por %p75, %p76
    %p78 = scmp.ne.s32.totalorder %s67, %s68
    %p79 = scmp.eq.s32.totalorder %s17, 0
    %p80 = por %p78, %p79
    %p81 = scmp.ne.s32.totalorder %s67, %s68
    %p82 = scmp.eq.s32.totalorder %s18, 1
    %p83 = por %p81, %p82
    %p85 = scmp.ne.s32.totalorder %s68, %s84
    %p86 = scmp.eq.s32.totalorder %s18, 0
    %p87 = por %p85, %p86
    %s88 = ssub.s32 %s19, %s31
    %s89 = ssub.s32 %s20, %s27
    %s90 = sor.u32 %s88, %s89
    %p91 = scmp.eq.s32.totalorder %s90, 0
    %s93 = sadd.s32 %s92, 1
    %s94 = scalar_select %p91, %s92, %s93
    %p97 = pneg %p91
    %p98 = scmp.eq.s32.totalorder %s12, 1
    %p99 = por %p97, %p98
    %p100 = scmp.ne.s32.totalorder %s92, %s95
    %p101 = scmp.eq.s32.totalorder %s12, 0
    %p102 = por %p100, %p101
    %p103 = scmp.ne.s32.totalorder %s92, %s95
    %p104 = scmp.eq.s32.totalorder %s17, 1
    %p105 = por %p103, %p104
    %p106 = scmp.ne.s32.totalorder %s95, %s96
    %p107 = scmp.eq.s32.totalorder %s17, 0
    %p108 = por %p106, %p107
    %p109 = scmp.ne.s32.totalorder %s95, %s96
    %p110 = scmp.eq.s32.totalorder %s18, 1
    %p111 = por %p109, %p110
    %p113 = scmp.ne.s32.totalorder %s96, %s112
    %p114 = scmp.eq.s32.totalorder %s18, 0
    %p115 = por %p113, %p114
    %s116 = ssub.s32 %s19, %s31
    %s117 = ssub.s32 %s20, %s27
    %s118 = sor.u32 %s116, %s117
    %p119 = scmp.eq.s32.totalorder %s118, 0
    %s121 = sadd.s32 %s120, 1
    %s122 = scalar_select %p119, %s120, %s121
    %p125 = pneg %p119
    %p126 = scmp.eq.s32.totalorder %s12, 1
    %p127 = por %p125, %p126
    %p128 = scmp.ne.s32.totalorder %s120, %s123
    %p129 = scmp.eq.s32.totalorder %s12, 0
    %p130 = por %p128, %p129
    %p131 = scmp.ne.s32.totalorder %s120, %s123
    %p132 = scmp.eq.s32.totalorder %s17, 1
    %p133 = por %p131, %p132
    %p134 = scmp.ne.s32.totalorder %s123, %s124
    %p135 = scmp.eq.s32.totalorder %s17, 0
    %p136 = por %p134, %p135
    %p137 = scmp.ne.s32.totalorder %s123, %s124
    %p138 = scmp.eq.s32.totalorder %s18, 1
    %p139 = por %p137, %p138
    %p141 = scmp.ne.s32.totalorder %s124, %s140
    %p142 = scmp.eq.s32.totalorder %s18, 0
    %p143 = por %p141, %p142
    %s145 = sadd.s32 %s144, 1
    %p148 = scmp.eq.s32.totalorder %s12, 1
    %p149 = scmp.ne.s32.totalorder %s144, %s146
    %p150 = scmp.eq.s32.totalorder %s12, 0
    %p151 = por %p149, %p150
    %p152 = scmp.ne.s32.totalorder %s144, %s146
    %p153 = scmp.eq.s32.totalorder %s17, 1
    %p154 = por %p152, %p153
    %p155 = scmp.ne.s32.totalorder %s146, %s147
    %p156 = scmp.eq.s32.totalorder %s17, 0
    %p157 = por %p155, %p156
    %p158 = scmp.ne.s32.totalorder %s146, %s147
    %p159 = scmp.eq.s32.totalorder %s18, 1
    %p160 = por %p158, %p159
    %p162 = scmp.ne.s32.totalorder %s147, %s161
    %p163 = scmp.eq.s32.totalorder %s18, 0
    %p164 = por %p162, %p163
    %s166 = sadd.s32 %s165, 1
    %p169 = scmp.eq.s32.totalorder %s12, 1
    %p170 = scmp.ne.s32.totalorder %s165, %s167
    %p171 = scmp.eq.s32.totalorder %s12, 0
    %p172 = por %p170, %p171
    %p173 = scmp.ne.s32.totalorder %s165, %s167
    %p174 = scmp.eq.s32.totalorder %s17, 1
    %p175 = por %p173, %p174
    %p176 = scmp.ne.s32.totalorder %s167, %s168
    %p177 = scmp.eq.s32.totalorder %s17, 0
    %p178 = por %p176, %p177
    %p179 = scmp.ne.s32.totalorder %s167, %s168
    %p180 = scmp.eq.s32.totalorder %s18, 1
    %p181 = por %p179, %p180
    %p183 = scmp.ne.s32.totalorder %s168, %s182
    %p184 = scmp.eq.s32.totalorder %s18, 0
    %p185 = por %p183, %p184
    %s186 = ssub.s32 %s19, %s31
    %s187 = ssub.s32 %s20, %s27
    %s188 = sor.u32 %s186, %s187
    %p189 = scmp.eq.s32.totalorder %s188, 0
    %s191 = sadd.s32 %s190, 1
    %s192 = scalar_select %p189, %s190, %s191
    %p195 = pneg %p189
    %p196 = scmp.eq.s32.totalorder %s12, 1
    %p197 = por %p195, %p196
    %p198 = scmp.ne.s32.totalorder %s190, %s193
    %p199 = scmp.eq.s32.totalorder %s12, 0
    %p200 = por %p198, %p199
    %p201 = scmp.ne.s32.totalorder %s190, %s193
    %p202 = scmp.eq.s32.totalorder %s17, 1
    %p203 = por %p201, %p202
    %p204 = scmp.ne.s32.totalorder %s193, %s194
    %p205 = scmp.eq.s32.totalorder %s17, 0
    %p206 = por %p204, %p205
    %p207 = scmp.ne.s32.totalorder %s193, %s194
    %p208 = scmp.eq.s32.totalorder %s18, 1
    %p209 = por %p207, %p208
    %p211 = scmp.ne.s32.totalorder %s194, %s210
    %p212 = scmp.eq.s32.totalorder %s18, 0
    %p213 = por %p211, %p212
    %p214 = scmp.le.s32.totalorder 1, %s12
    %p215 = scmp.lt.s32.totalorder %s12, 3
    %p216 = pnand %p214, %p215
    %p217 = pneg %p216
    // Predicated region
    $region9: #{channel_attention_forward.16} parent=5 // pred_check
      _
    $region10: #{channel_attention_forward.16} parent=5 // pred_check_branch
      %219 = sbr.rel (%p216) target = $region12
    $region11: #{channel_attention_forward.16} parent=5 // pred_region
      %s220 = ssub.s32 %s12, 1
      // Predicated region
      $region13: #{channel_attention_forward.16} parent=11 // pred_check
        %p221 = pneg %p157
      $region14: #{channel_attention_forward.16} parent=11 // pred_check_branch
        %223 = sbr.rel (%p221) target = $region16
      $region15: #{channel_attention_forward.16} parent=11 // pred_region
        _
      $region16: #{channel_attention_forward.16} parent=11 // pred_fallthru
        _
      // Predicated region
      $region17: #{channel_attention_forward.16} parent=11 // pred_check
        %p224 = pneg %p178
      $region18: #{channel_attention_forward.16} parent=11 // pred_check_branch
        %226 = sbr.rel (%p224) target = $region20
      $region19: #{channel_attention_forward.16} parent=11 // pred_region
        _
      $region20: #{channel_attention_forward.16} parent=11 // pred_fallthru
        _
    $region12: #{channel_attention_forward.16} parent=5 // pred_fallthru
      _
    %p227 = scmp.lt.s32.totalorder %s12, 2
    // Predicated region
    $region21: #{channel_attention_forward.16} parent=5 // pred_check
      %p228 = pneg %p227
    $region22: #{channel_attention_forward.16} parent=5 // pred_check_branch
      %230 = sbr.rel (%p228) target = $region24
    $region23: #{channel_attention_forward.16} parent=5 // pred_region
      // Predicated region
      $region25: #{channel_attention_forward.16} parent=23 // pred_check
        %p231 = pneg %p46
      $region26: #{channel_attention_forward.16} parent=23 // pred_check_branch
        %233 = sbr.rel (%p231) target = $region28
      $region27: #{channel_attention_forward.16} parent=23 // pred_region
        %p234 = scmp.lt.s32.totalorder %s19, 1
        %s235 = scalar_select %p234, %s19, 1
        %p236 = scmp.lt.s32.totalorder %s20, 0
        %s237 = scalar_select %p236, %s20, 0
        %s238 = sadd.s32 %s237, %s235
        %s239 = smul.addr %s238, 4
        %s240 = scalar_lea.vmem %s0, %s239
      $region28: #{channel_attention_forward.16} parent=23 // pred_fallthru
        _
      // Predicated region
      $region29: #{channel_attention_forward.16} parent=23 // pred_check
        %p241 = pneg %p74
      $region30: #{channel_attention_forward.16} parent=23 // pred_check_branch
        %243 = sbr.rel (%p241) target = $region32
      $region31: #{channel_attention_forward.16} parent=23 // pred_region
        %p244 = scmp.lt.s32.totalorder %s19, 1
        %s245 = scalar_select %p244, %s19, 1
        %p246 = scmp.lt.s32.totalorder %s20, 0
        %s247 = scalar_select %p246, %s20, 0
        %s248 = sadd.s32 %s247, %s245
        %s249 = smul.addr %s248, 4
        %s250 = scalar_lea.vmem %s1, %s249
      $region32: #{channel_attention_forward.16} parent=23 // pred_fallthru
        _
      // Predicated region
      $region33: #{channel_attention_forward.16} parent=23 // pred_check
        %p251 = pneg %p102
      $region34: #{channel_attention_forward.16} parent=23 // pred_check_branch
        %253 = sbr.rel (%p251) target = $region36
      $region35: #{channel_attention_forward.16} parent=23 // pred_region
        %p254 = scmp.lt.s32.totalorder %s19, 1
        %s255 = scalar_select %p254, %s19, 1
        %p256 = scmp.lt.s32.totalorder %s20, 0
        %s257 = scalar_select %p256, %s20, 0
        %s258 = sadd.s32 %s257, %s255
        %s259 = smul.addr %s258, 4
        %s260 = scalar_lea.vmem %s2, %s259
      $region36: #{channel_attention_forward.16} parent=23 // pred_fallthru
        _
      // Predicated region
      $region37: #{channel_attention_forward.16} parent=23 // pred_check
        %p261 = pneg %p130
      $region38: #{channel_attention_forward.16} parent=23 // pred_check_branch
        %263 = sbr.rel (%p261) target = $region40
      $region39: #{channel_attention_forward.16} parent=23 // pred_region
        %p264 = scmp.lt.s32.totalorder %s19, 1
        %s265 = scalar_select %p264, %s19, 1
        %p266 = scmp.lt.s32.totalorder %s20, 0
        %s267 = scalar_select %p266, %s20, 0
        %s268 = sadd.s32 %s267, %s265
        %s269 = smul.addr %s268, 4
        %s270 = scalar_lea.vmem %s3, %s269
      $region40: #{channel_attention_forward.16} parent=23 // pred_fallthru
        _
    $region24: #{channel_attention_forward.16} parent=5 // pred_fallthru
      _
    %p271 = scmp.le.s32.totalorder 1, %s12
    %p272 = scmp.lt.s32.totalorder %s12, 3
    %p273 = pnand %p271, %p272
    %p274 = pneg %p273
    // Predicated region
    $region41: #{channel_attention_forward.16} parent=5 // pred_check
      _
    $region42: #{channel_attention_forward.16} parent=5 // pred_check_branch
      %276 = sbr.rel (%p273) target = $region44
    $region43: #{channel_attention_forward.16} parent=5 // pred_region
      %s277 = ssub.s32 %s12, 1
      %p278 = scmp.lt.s32.totalorder %s21, 1
      %s279 = scalar_select %p278, %s21, 1
      %p280 = scmp.lt.s32.totalorder %s22, 0
      %s281 = scalar_select %p280, %s22, 0
      %s282 = sadd.s32 %s281, %s279
      %s283 = smul.addr %s282, 4
      %s284 = scalar_lea.vmem %s0, %s283
      %p285 = pneg %p52
      %p286 = pneg %p49
      %p287 = scmp.lt.s32.totalorder %s21, 1
      %s288 = scalar_select %p287, %s21, 1
      %p289 = scmp.lt.s32.totalorder %s22, 0
      %s290 = scalar_select %p289, %s22, 0
      %s291 = sadd.s32 %s290, %s288
      %s292 = smul.addr %s291, 4
      %s293 = scalar_lea.vmem %s1, %s292
      %p294 = pneg %p80
      %p295 = pneg %p77
      %p296 = scmp.lt.s32.totalorder %s21, 1
      %s297 = scalar_select %p296, %s21, 1
      %p298 = scmp.lt.s32.totalorder %s22, 0
      %s299 = scalar_select %p298, %s22, 0
      %s300 = sadd.s32 %s299, %s297
      %s301 = smul.addr %s300, 4
      %s302 = scalar_lea.vmem %s2, %s301
      %p303 = pneg %p108
      %p304 = pneg %p105
      %p305 = scmp.lt.s32.totalorder %s21, 1
      %s306 = scalar_select %p305, %s21, 1
      %p307 = scmp.lt.s32.totalorder %s22, 0
      %s308 = scalar_select %p307, %s22, 0
      %s309 = sadd.s32 %s308, %s306
      %s310 = smul.addr %s309, 4
      %s311 = scalar_lea.vmem %s3, %s310
      %p312 = pneg %p136
      %p313 = pneg %p133
      %p314 = pneg %p157
      %p315 = pneg %p154
      %p316 = pneg %p178
      %p317 = pneg %p175
      %p318 = pneg %p206
      %p319 = pneg %p203
      %p320 = scmp.lt.s32.totalorder %s21, 1
      %s321 = scalar_select %p320, %s21, 1
      %p322 = scmp.lt.s32.totalorder %s22, 0
      %s323 = scalar_select %p322, %s22, 0
      %s324 = sadd.s32 %s323, %s321
      %s325 = smul.addr %s324, 4
      %s326 = scalar_lea.vmem %s6, %s325
      %p327 = scmp.lt.s32.totalorder %s21, 1
      %s328 = scalar_select %p327, %s21, 1
      %p329 = scmp.lt.s32.totalorder %s22, 0
      %s330 = scalar_select %p329, %s22, 0
      %s331 = sadd.s32 %s330, %s328
      %s332 = smul.addr %s331, 4
      %s333 = scalar_lea.vmem %s0, %s332
      %p334 = scmp.lt.s32.totalorder %s21, 1
      %s335 = scalar_select %p334, %s21, 1
      %p336 = scmp.lt.s32.totalorder %s22, 0
      %s337 = scalar_select %p336, %s22, 0
      %s338 = sadd.s32 %s337, %s335
      %s339 = smul.addr %s338, 4
      %s340 = scalar_lea.vmem %s1, %s339
      %p341 = scmp.lt.s32.totalorder %s21, 1
      %s342 = scalar_select %p341, %s21, 1
      %p343 = scmp.lt.s32.totalorder %s22, 0
      %s344 = scalar_select %p343, %s22, 0
      %s345 = sadd.s32 %s344, %s342
      %s346 = smul.addr %s345, 4
      %s347 = scalar_lea.vmem %s2, %s346
      %p348 = scmp.lt.s32.totalorder %s21, 1
      %s349 = scalar_select %p348, %s21, 1
      %p350 = scmp.lt.s32.totalorder %s22, 0
      %s351 = scalar_select %p350, %s22, 0
      %s352 = sadd.s32 %s351, %s349
      %s353 = smul.addr %s352, 4
      %s354 = scalar_lea.vmem %s3, %s353
      %p355 = scmp.lt.s32.totalorder %s21, 1
      %s356 = scalar_select %p355, %s21, 1
      %p357 = scmp.lt.s32.totalorder %s22, 0
      %s358 = scalar_select %p357, %s22, 0
      %s359 = sadd.s32 %s358, %s356
      %s360 = smul.addr %s359, 4
      %s361 = scalar_lea.vmem %s6, %s360
      %v362 = vld [vmem:[%s4] sm:$0xf]
      %v363 = vld [vmem:[%s333] sm:$0xf]
      %v364 = vmul.f32 %v363, %v362
      %v365 = vld [vmem:[%s340] sm:$0xf]
      %367 = vrot.lane.b32.xlu0 %v362, 127
      %v368 = vpop.permute.xlu0 %367
      %v370 = vmul.f32 %v365, %v368
      %v371 = vadd.f32 %v364, %v370
      %v372 = vld [vmem:[%s347] sm:$0xf]
      %373 = vrot.lane.b32.xlu0 %v362, 126
      %v374 = vpop.permute.xlu0 %373
      %v376 = vmul.f32 %v372, %v374
      %v377 = vadd.f32 %v371, %v376
      %v378 = vld [vmem:[%s354] sm:$0xf]
      %379 = vrot.lane.b32.xlu0 %v362, 125
      %v380 = vpop.permute.xlu0 %379
      %v382 = vmul.f32 %v378, %v380
      %v383 = vadd.f32 %v377, %v382
      %v384 = vld [vmem:[%s5] sm:$0xf]
      %v385 = vadd.f32 %v383, %v384
      %vm386 = vcmask 3072
      %387 = vst.msk [vmem:[%s361] sm:$0xf] %vm386, %v385
      %p388 = scmp.lt.s32.totalorder %s21, 1
      %s389 = scalar_select %p388, %s21, 1
      %p390 = scmp.lt.s32.totalorder %s22, 0
      %s391 = scalar_select %p390, %s22, 0
      %s392 = sadd.s32 %s391, %s389
      %s393 = smul.addr %s392, 4
      %s394 = scalar_lea.vmem %s6, %s393
      // Predicated region
      $region45: #{channel_attention_forward.16} parent=43 // pred_check
        %p395 = pneg %p203
      $region46: #{channel_attention_forward.16} parent=43 // pred_check_branch
        %397 = sbr.rel (%p395) target = $region48
      $region47: #{channel_attention_forward.16} parent=43 // pred_region
        _
      $region48: #{channel_attention_forward.16} parent=43 // pred_fallthru
        _
    $region44: #{channel_attention_forward.16} parent=5 // pred_fallthru
      _
    %p398 = scmp.le.s32.totalorder 2, %s12
    // Predicated region
    $region49: #{channel_attention_forward.16} parent=5 // pred_check
      %p399 = pneg %p398
    $region50: #{channel_attention_forward.16} parent=5 // pred_check_branch
      %401 = sbr.rel (%p399) target = $region52
    $region51: #{channel_attention_forward.16} parent=5 // pred_region
      %s402 = ssub.s32 %s12, 2
      // Predicated region
      $region53: #{channel_attention_forward.16} parent=51 // pred_check
        %p403 = pneg %p209
      $region54: #{channel_attention_forward.16} parent=51 // pred_check_branch
        %405 = sbr.rel (%p403) target = $region56
      $region55: #{channel_attention_forward.16} parent=51 // pred_region
        %p406 = scmp.lt.s32.totalorder %s23, 1
        %s407 = scalar_select %p406, %s23, 1
        %p408 = scmp.lt.s32.totalorder %s24, 0
        %s409 = scalar_select %p408, %s24, 0
        %s410 = sadd.s32 %s409, %s407
        %s411 = smul.addr %s410, 4
        %s412 = scalar_lea.vmem %s6, %s411
      $region56: #{channel_attention_forward.16} parent=51 // pred_fallthru
        _
    $region52: #{channel_attention_forward.16} parent=5 // pred_fallthru
      _
  $region6: #{channel_attention_forward.16} parent=0 // loop_footer
    %s16 = sadd.s32 1, %s12
  $region7: #{channel_attention_forward.16} parent=0 // loop_footer_branch
    %11 = sbr.rel target = $region3
  $region8: #{channel_attention_forward.16} parent=0 // loop_exit
    _

// kernel: channel_attention_forward.15
$region0: #{channel_attention_forward.15}
  #allocation0 [shape = 'u32[]', space=smem, size = 0x4, offset = 0x4, fixed_abs, tag = 'smem constant byte address 0x4 - core index']
  #allocation1 [shape = 'u32[144,128]{1,0:T(1,128)}', space=vmem, size = 0x12000, scoped, tag = 'internal scratch']
  %s0 = inlined_call_operand.vmem [shape: f32[2,4,4], index: 0, kind: input, shape index: {}]
  %s1 = inlined_call_operand.vmem [shape: f32[2,4,4], index: 1, kind: input, shape index: {}]
  %s2 = inlined_call_operand.vmem [shape: f32[2,4,4], index: 2, kind: input, shape index: {}]
  %s3 = inlined_call_operand.vmem [shape: f32[2,4,4], index: 3, kind: input, shape index: {}]
  %s4 = inlined_call_operand.vmem [shape: f32[1,4,4], index: 4, kind: input, shape index: {}]
  %s5 = inlined_call_operand.vmem [shape: f32[1,4,1], index: 5, kind: input, shape index: {}]
  %s6 = inlined_call_operand.vmem [shape: f32[2,4,4], index: 6, kind: output, shape index: {}]
  %s7 = sld [smem:[#allocation0]]
  $region57: #{channel_attention_forward.15} parent=0
    _
  %s9 = ssub.s32 1, %s7
  %s10 = scalar_select 0, %s9, %s7
  loop: start=0, step=1, limit=4
  $region2: #{channel_attention_forward.15} parent=0 // loop_pre_header
    _
  $region3: #{channel_attention_forward.15} parent=0 // loop_header
    %s12 = sphi 0, %s16
    %p13 = scmp.ge.s32.totalorder %s12, 4
    %s19 = sphi 0, %s31
    %s20 = sphi 0, %s27
    %s21 = sphi 0, %s19
    %s22 = sphi 0, %s20
    %s23 = sphi 0, %s21
    %s24 = sphi 0, %s22
    %s36 = sphi 0, %s38
    %s39 = sphi 0, %s36
    %s40 = sphi 0, %s39
    %s56 = sphi 0, %s40
    %s64 = sphi 0, %s66
    %s67 = sphi 0, %s64
    %s68 = sphi 0, %s67
    %s84 = sphi 0, %s68
    %s92 = sphi 0, %s94
    %s95 = sphi 0, %s92
    %s96 = sphi 0, %s95
    %s112 = sphi 0, %s96
    %s120 = sphi 0, %s122
    %s123 = sphi 0, %s120
    %s124 = sphi 0, %s123
    %s140 = sphi 0, %s124
    %s144 = sphi 0, %s144
    %s146 = sphi 0, %s144
    %s147 = sphi 0, %s146
    %s161 = sphi 0, %s147
    %s165 = sphi 0, %s165
    %s167 = sphi 0, %s165
    %s168 = sphi 0, %s167
    %s182 = sphi 0, %s168
    %s190 = sphi 0, %s192
    %s193 = sphi 0, %s190
    %s194 = sphi 0, %s193
    %s210 = sphi 0, %s194
  $region4: #{channel_attention_forward.15} parent=0 // loop_header_branch
    %15 = sbr.rel (%p13) target = $region8
  $region5: #{channel_attention_forward.15} parent=0 // loop_body
    %s17 = ssub.s32 %s12, 1
    %s18 = ssub.s32 %s12, 2
    %s25 = sadd.s32 1, %s20
    %p26 = scmp.ge.s32.totalorder %s25, 1
    %s27 = scalar_select %p26, 0, %s25
    %s28 = sadd.s32 1, %s19
    %s29 = scalar_select %p26, %s28, %s19
    %p30 = scmp.ge.s32.totalorder %s29, 2
    %s31 = scalar_select %p30, 0, %s29
    %s32 = ssub.s32 %s19, %s31
    %s33 = ssub.s32 %s20, %s27
    %s34 = sor.u32 %s32, %s33
    %p35 = scmp.eq.s32.totalorder %s34, 0
    %s37 = sadd.s32 %s36, 1
    %s38 = scalar_select %p35, %s36, %s37
    %p41 = pneg %p35
    %p42 = scmp.eq.s32.totalorder %s12, 1
    %p43 = por %p41, %p42
    %p44 = scmp.ne.s32.totalorder %s36, %s39
    %p45 = scmp.eq.s32.totalorder %s12, 0
    %p46 = por %p44, %p45
    %p47 = scmp.ne.s32.totalorder %s36, %s39
    %p48 = scmp.eq.s32.totalorder %s17, 1
    %p49 = por %p47, %p48
    %p50 = scmp.ne.s32.totalorder %s39, %s40
    %p51 = scmp.eq.s32.totalorder %s17, 0
    %p52 = por %p50, %p51
    %p53 = scmp.ne.s32.totalorder %s39, %s40
    %p54 = scmp.eq.s32.totalorder %s18, 1
    %p55 = por %p53, %p54
    %p57 = scmp.ne.s32.totalorder %s40, %s56
    %p58 = scmp.eq.s32.totalorder %s18, 0
    %p59 = por %p57, %p58
    %s60 = ssub.s32 %s19, %s31
    %s61 = ssub.s32 %s20, %s27
    %s62 = sor.u32 %s60, %s61
    %p63 = scmp.eq.s32.totalorder %s62, 0
    %s65 = sadd.s32 %s64, 1
    %s66 = scalar_select %p63, %s64, %s65
    %p69 = pneg %p63
    %p70 = scmp.eq.s32.totalorder %s12, 1
    %p71 = por %p69, %p70
    %p72 = scmp.ne.s32.totalorder %s64, %s67
    %p73 = scmp.eq.s32.totalorder %s12, 0
    %p74 = por %p72, %p73
    %p75 = scmp.ne.s32.totalorder %s64, %s67
    %p76 = scmp.eq.s32.totalorder %s17, 1
    %p77 = por %p75, %p76
    %p78 = scmp.ne.s32.totalorder %s67, %s68
    %p79 = scmp.eq.s32.totalorder %s17, 0
    %p80 = por %p78, %p79
    %p81 = scmp.ne.s32.totalorder %s67, %s68
    %p82 = scmp.eq.s32.totalorder %s18, 1
    %p83 = por %p81, %p82
    %p85 = scmp.ne.s32.totalorder %s68, %s84
    %p86 = scmp.eq.s32.totalorder %s18, 0
    %p87 = por %p85, %p86
    %s88 = ssub.s32 %s19, %s31
    %s89 = ssub.s32 %s20, %s27
    %s90 = sor.u32 %s88, %s89
    %p91 = scmp.eq.s32.totalorder %s90, 0
    %s93 = sadd.s32 %s92, 1
    %s94 = scalar_select %p91, %s92, %s93
    %p97 = pneg %p91
    %p98 = scmp.eq.s32.totalorder %s12, 1
    %p99 = por %p97, %p98
    %p100 = scmp.ne.s32.totalorder %s92, %s95
    %p101 = scmp.eq.s32.totalorder %s12, 0
    %p102 = por %p100, %p101
    %p103 = scmp.ne.s32.totalorder %s92, %s95
    %p104 = scmp.eq.s32.totalorder %s17, 1
    %p105 = por %p103, %p104
    %p106 = scmp.ne.s32.totalorder %s95, %s96
    %p107 = scmp.eq.s32.totalorder %s17, 0
    %p108 = por %p106, %p107
    %p109 = scmp.ne.s32.totalorder %s95, %s96
    %p110 = scmp.eq.s32.totalorder %s18, 1
    %p111 = por %p109, %p110
    %p113 = scmp.ne.s32.totalorder %s96, %s112
    %p114 = scmp.eq.s32.totalorder %s18, 0
    %p115 = por %p113, %p114
    %s116 = ssub.s32 %s19, %s31
    %s117 = ssub.s32 %s20, %s27
    %s118 = sor.u32 %s116, %s117
    %p119 = scmp.eq.s32.totalorder %s118, 0
    %s121 = sadd.s32 %s120, 1
    %s122 = scalar_select %p119, %s120, %s121
    %p125 = pneg %p119
    %p126 = scmp.eq.s32.totalorder %s12, 1
    %p127 = por %p125, %p126
    %p128 = scmp.ne.s32.totalorder %s120, %s123
    %p129 = scmp.eq.s32.totalorder %s12, 0
    %p130 = por %p128, %p129
    %p131 = scmp.ne.s32.totalorder %s120, %s123
    %p132 = scmp.eq.s32.totalorder %s17, 1
    %p133 = por %p131, %p132
    %p134 = scmp.ne.s32.totalorder %s123, %s124
    %p135 = scmp.eq.s32.totalorder %s17, 0
    %p136 = por %p134, %p135
    %p137 = scmp.ne.s32.totalorder %s123, %s124
    %p138 = scmp.eq.s32.totalorder %s18, 1
    %p139 = por %p137, %p138
    %p141 = scmp.ne.s32.totalorder %s124, %s140
    %p142 = scmp.eq.s32.totalorder %s18, 0
    %p143 = por %p141, %p142
    %s145 = sadd.s32 %s144, 1
    %p148 = scmp.eq.s32.totalorder %s12, 1
    %p149 = scmp.ne.s32.totalorder %s144, %s146
    %p150 = scmp.eq.s32.totalorder %s12, 0
    %p151 = por %p149, %p150
    %p152 = scmp.ne.s32.totalorder %s144, %s146
    %p153 = scmp.eq.s32.totalorder %s17, 1
    %p154 = por %p152, %p153
    %p155 = scmp.ne.s32.totalorder %s146, %s147
    %p156 = scmp.eq.s32.totalorder %s17, 0
    %p157 = por %p155, %p156
    %p158 = scmp.ne.s32.totalorder %s146, %s147
    %p159 = scmp.eq.s32.totalorder %s18, 1
    %p160 = por %p158, %p159
    %p162 = scmp.ne.s32.totalorder %s147, %s161
    %p163 = scmp.eq.s32.totalorder %s18, 0
    %p164 = por %p162, %p163
    %s166 = sadd.s32 %s165, 1
    %p169 = scmp.eq.s32.totalorder %s12, 1
    %p170 = scmp.ne.s32.totalorder %s165, %s167
    %p171 = scmp.eq.s32.totalorder %s12, 0
    %p172 = por %p170, %p171
    %p173 = scmp.ne.s32.totalorder %s165, %s167
    %p174 = scmp.eq.s32.totalorder %s17, 1
    %p175 = por %p173, %p174
    %p176 = scmp.ne.s32.totalorder %s167, %s168
    %p177 = scmp.eq.s32.totalorder %s17, 0
    %p178 = por %p176, %p177
    %p179 = scmp.ne.s32.totalorder %s167, %s168
    %p180 = scmp.eq.s32.totalorder %s18, 1
    %p181 = por %p179, %p180
    %p183 = scmp.ne.s32.totalorder %s168, %s182
    %p184 = scmp.eq.s32.totalorder %s18, 0
    %p185 = por %p183, %p184
    %s186 = ssub.s32 %s19, %s31
    %s187 = ssub.s32 %s20, %s27
    %s188 = sor.u32 %s186, %s187
    %p189 = scmp.eq.s32.totalorder %s188, 0
    %s191 = sadd.s32 %s190, 1
    %s192 = scalar_select %p189, %s190, %s191
    %p195 = pneg %p189
    %p196 = scmp.eq.s32.totalorder %s12, 1
    %p197 = por %p195, %p196
    %p198 = scmp.ne.s32.totalorder %s190, %s193
    %p199 = scmp.eq.s32.totalorder %s12, 0
    %p200 = por %p198, %p199
    %p201 = scmp.ne.s32.totalorder %s190, %s193
    %p202 = scmp.eq.s32.totalorder %s17, 1
    %p203 = por %p201, %p202
    %p204 = scmp.ne.s32.totalorder %s193, %s194
    %p205 = scmp.eq.s32.totalorder %s17, 0
    %p206 = por %p204, %p205
    %p207 = scmp.ne.s32.totalorder %s193, %s194
    %p208 = scmp.eq.s32.totalorder %s18, 1
    %p209 = por %p207, %p208
    %p211 = scmp.ne.s32.totalorder %s194, %s210
    %p212 = scmp.eq.s32.totalorder %s18, 0
    %p213 = por %p211, %p212
    %p214 = scmp.le.s32.totalorder 1, %s12
    %p215 = scmp.lt.s32.totalorder %s12, 3
    %p216 = pnand %p214, %p215
    %p217 = pneg %p216
    // Predicated region
    $region9: #{channel_attention_forward.15} parent=5 // pred_check
      _
    $region10: #{channel_attention_forward.15} parent=5 // pred_check_branch
      %219 = sbr.rel (%p216) target = $region12
    $region11: #{channel_attention_forward.15} parent=5 // pred_region
      %s220 = ssub.s32 %s12, 1
      // Predicated region
      $region13: #{channel_attention_forward.15} parent=11 // pred_check
        %p221 = pneg %p157
      $region14: #{channel_attention_forward.15} parent=11 // pred_check_branch
        %223 = sbr.rel (%p221) target = $region16
      $region15: #{channel_attention_forward.15} parent=11 // pred_region
        _
      $region16: #{channel_attention_forward.15} parent=11 // pred_fallthru
        _
      // Predicated region
      $region17: #{channel_attention_forward.15} parent=11 // pred_check
        %p224 = pneg %p178
      $region18: #{channel_attention_forward.15} parent=11 // pred_check_branch
        %226 = sbr.rel (%p224) target = $region20
      $region19: #{channel_attention_forward.15} parent=11 // pred_region
        _
      $region20: #{channel_attention_forward.15} parent=11 // pred_fallthru
        _
    $region12: #{channel_attention_forward.15} parent=5 // pred_fallthru
      _
    %p227 = scmp.lt.s32.totalorder %s12, 2
    // Predicated region
    $region21: #{channel_attention_forward.15} parent=5 // pred_check
      %p228 = pneg %p227
    $region22: #{channel_attention_forward.15} parent=5 // pred_check_branch
      %230 = sbr.rel (%p228) target = $region24
    $region23: #{channel_attention_forward.15} parent=5 // pred_region
      // Predicated region
      $region25: #{channel_attention_forward.15} parent=23 // pred_check
        %p231 = pneg %p46
      $region26: #{channel_attention_forward.15} parent=23 // pred_check_branch
        %233 = sbr.rel (%p231) target = $region28
      $region27: #{channel_attention_forward.15} parent=23 // pred_region
        %p234 = scmp.lt.s32.totalorder %s19, 1
        %s235 = scalar_select %p234, %s19, 1
        %p236 = scmp.lt.s32.totalorder %s20, 0
        %s237 = scalar_select %p236, %s20, 0
        %s238 = sadd.s32 %s237, %s235
        %s239 = smul.addr %s238, 4
        %s240 = scalar_lea.vmem %s0, %s239
      $region28: #{channel_attention_forward.15} parent=23 // pred_fallthru
        _
      // Predicated region
      $region29: #{channel_attention_forward.15} parent=23 // pred_check
        %p241 = pneg %p74
      $region30: #{channel_attention_forward.15} parent=23 // pred_check_branch
        %243 = sbr.rel (%p241) target = $region32
      $region31: #{channel_attention_forward.15} parent=23 // pred_region
        %p244 = scmp.lt.s32.totalorder %s19, 1
        %s245 = scalar_select %p244, %s19, 1
        %p246 = scmp.lt.s32.totalorder %s20, 0
        %s247 = scalar_select %p246, %s20, 0
        %s248 = sadd.s32 %s247, %s245
        %s249 = smul.addr %s248, 4
        %s250 = scalar_lea.vmem %s1, %s249
      $region32: #{channel_attention_forward.15} parent=23 // pred_fallthru
        _
      // Predicated region
      $region33: #{channel_attention_forward.15} parent=23 // pred_check
        %p251 = pneg %p102
      $region34: #{channel_attention_forward.15} parent=23 // pred_check_branch
        %253 = sbr.rel (%p251) target = $region36
      $region35: #{channel_attention_forward.15} parent=23 // pred_region
        %p254 = scmp.lt.s32.totalorder %s19, 1
        %s255 = scalar_select %p254, %s19, 1
        %p256 = scmp.lt.s32.totalorder %s20, 0
        %s257 = scalar_select %p256, %s20, 0
        %s258 = sadd.s32 %s257, %s255
        %s259 = smul.addr %s258, 4
        %s260 = scalar_lea.vmem %s2, %s259
      $region36: #{channel_attention_forward.15} parent=23 // pred_fallthru
        _
      // Predicated region
      $region37: #{channel_attention_forward.15} parent=23 // pred_check
        %p261 = pneg %p130
      $region38: #{channel_attention_forward.15} parent=23 // pred_check_branch
        %263 = sbr.rel (%p261) target = $region40
      $region39: #{channel_attention_forward.15} parent=23 // pred_region
        %p264 = scmp.lt.s32.totalorder %s19, 1
        %s265 = scalar_select %p264, %s19, 1
        %p266 = scmp.lt.s32.totalorder %s20, 0
        %s267 = scalar_select %p266, %s20, 0
        %s268 = sadd.s32 %s267, %s265
        %s269 = smul.addr %s268, 4
        %s270 = scalar_lea.vmem %s3, %s269
      $region40: #{channel_attention_forward.15} parent=23 // pred_fallthru
        _
    $region24: #{channel_attention_forward.15} parent=5 // pred_fallthru
      _
    %p271 = scmp.le.s32.totalorder 1, %s12
    %p272 = scmp.lt.s32.totalorder %s12, 3
    %p273 = pnand %p271, %p272
    %p274 = pneg %p273
    // Predicated region
    $region41: #{channel_attention_forward.15} parent=5 // pred_check
      _
    $region42: #{channel_attention_forward.15} parent=5 // pred_check_branch
      %276 = sbr.rel (%p273) target = $region44
    $region43: #{channel_attention_forward.15} parent=5 // pred_region
      %s277 = ssub.s32 %s12, 1
      %p278 = scmp.lt.s32.totalorder %s21, 1
      %s279 = scalar_select %p278, %s21, 1
      %p280 = scmp.lt.s32.totalorder %s22, 0
      %s281 = scalar_select %p280, %s22, 0
      %s282 = sadd.s32 %s281, %s279
      %s283 = smul.addr %s282, 4
      %s284 = scalar_lea.vmem %s0, %s283
      %p285 = pneg %p52
      %p286 = pneg %p49
      %p287 = scmp.lt.s32.totalorder %s21, 1
      %s288 = scalar_select %p287, %s21, 1
      %p289 = scmp.lt.s32.totalorder %s22, 0
      %s290 = scalar_select %p289, %s22, 0
      %s291 = sadd.s32 %s290, %s288
      %s292 = smul.addr %s291, 4
      %s293 = scalar_lea.vmem %s1, %s292
      %p294 = pneg %p80
      %p295 = pneg %p77
      %p296 = scmp.lt.s32.totalorder %s21, 1
      %s297 = scalar_select %p296, %s21, 1
      %p298 = scmp.lt.s32.totalorder %s22, 0
      %s299 = scalar_select %p298, %s22, 0
      %s300 = sadd.s32 %s299, %s297
      %s301 = smul.addr %s300, 4
      %s302 = scalar_lea.vmem %s2, %s301
      %p303 = pneg %p108
      %p304 = pneg %p105
      %p305 = scmp.lt.s32.totalorder %s21, 1
      %s306 = scalar_select %p305, %s21, 1
      %p307 = scmp.lt.s32.totalorder %s22, 0
      %s308 = scalar_select %p307, %s22, 0
      %s309 = sadd.s32 %s308, %s306
      %s310 = smul.addr %s309, 4
      %s311 = scalar_lea.vmem %s3, %s310
      %p312 = pneg %p136
      %p313 = pneg %p133
      %p314 = pneg %p157
      %p315 = pneg %p154
      %p316 = pneg %p178
      %p317 = pneg %p175
      %p318 = pneg %p206
      %p319 = pneg %p203
      %p320 = scmp.lt.s32.totalorder %s21, 1
      %s321 = scalar_select %p320, %s21, 1
      %p322 = scmp.lt.s32.totalorder %s22, 0
      %s323 = scalar_select %p322, %s22, 0
      %s324 = sadd.s32 %s323, %s321
      %s325 = smul.addr %s324, 4
      %s326 = scalar_lea.vmem %s6, %s325
      %p327 = scmp.lt.s32.totalorder %s21, 1
      %s328 = scalar_select %p327, %s21, 1
      %p329 = scmp.lt.s32.totalorder %s22, 0
      %s330 = scalar_select %p329, %s22, 0
      %s331 = sadd.s32 %s330, %s328
      %s332 = smul.addr %s331, 4
      %s333 = scalar_lea.vmem %s0, %s332
      %p334 = scmp.lt.s32.totalorder %s21, 1
      %s335 = scalar_select %p334, %s21, 1
      %p336 = scmp.lt.s32.totalorder %s22, 0
      %s337 = scalar_select %p336, %s22, 0
      %s338 = sadd.s32 %s337, %s335
      %s339 = smul.addr %s338, 4
      %s340 = scalar_lea.vmem %s1, %s339
      %p341 = scmp.lt.s32.totalorder %s21, 1
      %s342 = scalar_select %p341, %s21, 1
      %p343 = scmp.lt.s32.totalorder %s22, 0
      %s344 = scalar_select %p343, %s22, 0
      %s345 = sadd.s32 %s344, %s342
      %s346 = smul.addr %s345, 4
      %s347 = scalar_lea.vmem %s2, %s346
      %p348 = scmp.lt.s32.totalorder %s21, 1
      %s349 = scalar_select %p348, %s21, 1
      %p350 = scmp.lt.s32.totalorder %s22, 0
      %s351 = scalar_select %p350, %s22, 0
      %s352 = sadd.s32 %s351, %s349
      %s353 = smul.addr %s352, 4
      %s354 = scalar_lea.vmem %s3, %s353
      %p355 = scmp.lt.s32.totalorder %s21, 1
      %s356 = scalar_select %p355, %s21, 1
      %p357 = scmp.lt.s32.totalorder %s22, 0
      %s358 = scalar_select %p357, %s22, 0
      %s359 = sadd.s32 %s358, %s356
      %s360 = smul.addr %s359, 4
      %s361 = scalar_lea.vmem %s6, %s360
      %v362 = vld [vmem:[%s4] sm:$0xf]
      %v363 = vld [vmem:[%s333] sm:$0xf]
      %365 = vset.pattern.permute.xlu0 0
      %366 = vperm.xlu0 %365, %v362
      %v367 = vpop.permute.xlu0 %366
      %v369 = vmul.f32 %v363, %v367
      %v370 = vld [vmem:[%s340] sm:$0xf]
      %371 = vset.pattern.permute.xlu0 1
      %372 = vperm.xlu0 %371, %v362
      %v373 = vpop.permute.xlu0 %372
      %v375 = vmul.f32 %v370, %v373
      %v376 = vadd.f32 %v369, %v375
      %v377 = vld [vmem:[%s347] sm:$0xf]
      %378 = vset.pattern.permute.xlu0 2
      %379 = vperm.xlu0 %378, %v362
      %v380 = vpop.permute.xlu0 %379
      %v382 = vmul.f32 %v377, %v380
      %v383 = vadd.f32 %v376, %v382
      %v384 = vld [vmem:[%s354] sm:$0xf]
      %385 = vset.pattern.permute.xlu0 3
      %386 = vperm.xlu0 %385, %v362
      %v387 = vpop.permute.xlu0 %386
      %v389 = vmul.f32 %v384, %v387
      %v390 = vadd.f32 %v383, %v389
      %v391 = vld [vmem:[%s5] sm:$0xf]
      %393 = vset.pattern.permute.xlu0 0
      %394 = vperm.xlu0 %393, %v391
      %v395 = vpop.permute.xlu0 %394
      %v397 = vadd.f32 %v390, %v395
      %vm398 = vcmask 27648
      %399 = vst.msk [vmem:[%s361] sm:$0xf] %vm398, %v397
      %p400 = scmp.lt.s32.totalorder %s21, 1
      %s401 = scalar_select %p400, %s21, 1
      %p402 = scmp.lt.s32.totalorder %s22, 0
      %s403 = scalar_select %p402, %s22, 0
      %s404 = sadd.s32 %s403, %s401
      %s405 = smul.addr %s404, 4
      %s406 = scalar_lea.vmem %s6, %s405
      // Predicated region
      $region45: #{channel_attention_forward.15} parent=43 // pred_check
        %p407 = pneg %p203
      $region46: #{channel_attention_forward.15} parent=43 // pred_check_branch
        %409 = sbr.rel (%p407) target = $region48
      $region47: #{channel_attention_forward.15} parent=43 // pred_region
        _
      $region48: #{channel_attention_forward.15} parent=43 // pred_fallthru
        _
    $region44: #{channel_attention_forward.15} parent=5 // pred_fallthru
      _
    %p410 = scmp.le.s32.totalorder 2, %s12
    // Predicated region
    $region49: #{channel_attention_forward.15} parent=5 // pred_check
      %p411 = pneg %p410
    $region50: #{channel_attention_forward.15} parent=5 // pred_check_branch
      %413 = sbr.rel (%p411) target = $region52
    $region51: #{channel_attention_forward.15} parent=5 // pred_region
      %s414 = ssub.s32 %s12, 2
      // Predicated region
      $region53: #{channel_attention_forward.15} parent=51 // pred_check
        %p415 = pneg %p209
      $region54: #{channel_attention_forward.15} parent=51 // pred_check_branch
        %417 = sbr.rel (%p415) target = $region56
      $region55: #{channel_attention_forward.15} parent=51 // pred_region
        %p418 = scmp.lt.s32.totalorder %s23, 1
        %s419 = scalar_select %p418, %s23, 1
        %p420 = scmp.lt.s32.totalorder %s24, 0
        %s421 = scalar_select %p420, %s24, 0
        %s422 = sadd.s32 %s421, %s419
        %s423 = smul.addr %s422, 4
        %s424 = scalar_lea.vmem %s6, %s423
      $region56: #{channel_attention_forward.15} parent=51 // pred_fallthru
        _
    $region52: #{channel_attention_forward.15} parent=5 // pred_fallthru
      _
  $region6: #{channel_attention_forward.15} parent=0 // loop_footer
    %s16 = sadd.s32 1, %s12
  $region7: #{channel_attention_forward.15} parent=0 // loop_footer_branch
    %11 = sbr.rel target = $region3
  $region8: #{channel_attention_forward.15} parent=0 // loop_exit
    _

// kernel: channel_attention_forward.17
$region0: #{channel_attention_forward.17}
  #allocation0 [shape = 'u32[]', space=smem, size = 0x4, offset = 0x4, fixed_abs, tag = 'smem constant byte address 0x4 - core index']
  #allocation1 [shape = 'u32[144,128]{1,0:T(1,128)}', space=vmem, size = 0x12000, scoped, tag = 'internal scratch']
  #allocation2 [shape = 'bf16[4,4]{1,0:T(4,128)(2,1)}', space=vmem, size = 0x400, scoped, tag = 'scratch operand']
  %s0 = inlined_call_operand.vmem [shape: bf16[2,4,1], index: 0, kind: input, shape index: {}]
  %s1 = inlined_call_operand.vmem [shape: bf16[2,4,1], index: 1, kind: input, shape index: {}]
  %s2 = inlined_call_operand.vmem [shape: bf16[4,4], index: 2, kind: input, shape index: {}]
  %s3 = inlined_call_operand.vmem [shape: bf16[2,4,256], index: 3, kind: input, shape index: {}]
  %s4 = inlined_call_operand.vmem [shape: bf16[2,4,256], index: 4, kind: output, shape index: {}]
  %s5 = sld [smem:[#allocation0]]
  $region53: #{channel_attention_forward.17} parent=0
    _
  %s7 = ssub.s32 1, %s5
  %s8 = scalar_select 0, %s7, %s5
  loop: start=0, step=1, limit=6
  $region2: #{channel_attention_forward.17} parent=0 // loop_pre_header
    _
  $region3: #{channel_attention_forward.17} parent=0 // loop_header
    %s10 = sphi 0, %s14
    %p11 = scmp.ge.s32.totalorder %s10, 6
    %s17 = sphi 0, %s29
    %s18 = sphi 0, %s25
    %s19 = sphi 0, %s17
    %s20 = sphi 0, %s18
    %s21 = sphi 0, %s19
    %s22 = sphi 0, %s20
    %s32 = sphi 0, %s34
    %s35 = sphi 0, %s32
    %s36 = sphi 0, %s35
    %s52 = sphi 0, %s36
    %s58 = sphi 0, %s60
    %s61 = sphi 0, %s58
    %s62 = sphi 0, %s61
    %s78 = sphi 0, %s62
    %s82 = sphi 0, %s82
    %s84 = sphi 0, %s82
    %s85 = sphi 0, %s84
    %s99 = sphi 0, %s85
    %s107 = sphi 0, %s109
    %s110 = sphi 0, %s107
    %s111 = sphi 0, %s110
    %s127 = sphi 0, %s111
    %s135 = sphi 0, %s137
    %s138 = sphi 0, %s135
    %s139 = sphi 0, %s138
    %s155 = sphi 0, %s139
  $region4: #{channel_attention_forward.17} parent=0 // loop_header_branch
    %13 = sbr.rel (%p11) target = $region8
  $region5: #{channel_attention_forward.17} parent=0 // loop_body
    %s15 = ssub.s32 %s10, 1
    %s16 = ssub.s32 %s10, 2
    %s23 = sadd.s32 1, %s18
    %p24 = scmp.ge.s32.totalorder %s23, 2
    %s25 = scalar_select %p24, 0, %s23
    %s26 = sadd.s32 1, %s17
    %s27 = scalar_select %p24, %s26, %s17
    %p28 = scmp.ge.s32.totalorder %s27, 2
    %s29 = scalar_select %p28, 0, %s27
    %s30 = ssub.s32 %s17, %s29
    %p31 = scmp.eq.s32.totalorder %s30, 0
    %s33 = sadd.s32 %s32, 1
    %s34 = scalar_select %p31, %s32, %s33
    %p37 = pneg %p31
    %p38 = scmp.eq.s32.totalorder %s10, 3
    %p39 = por %p37, %p38
    %p40 = scmp.ne.s32.totalorder %s32, %s35
    %p41 = scmp.eq.s32.totalorder %s10, 0
    %p42 = por %p40, %p41
    %p43 = scmp.ne.s32.totalorder %s32, %s35
    %p44 = scmp.eq.s32.totalorder %s15, 3
    %p45 = por %p43, %p44
    %p46 = scmp.ne.s32.totalorder %s35, %s36
    %p47 = scmp.eq.s32.totalorder %s15, 0
    %p48 = por %p46, %p47
    %p49 = scmp.ne.s32.totalorder %s35, %s36
    %p50 = scmp.eq.s32.totalorder %s16, 3
    %p51 = por %p49, %p50
    %p53 = scmp.ne.s32.totalorder %s36, %s52
    %p54 = scmp.eq.s32.totalorder %s16, 0
    %p55 = por %p53, %p54
    %s56 = ssub.s32 %s17, %s29
    %p57 = scmp.eq.s32.totalorder %s56, 0
    %s59 = sadd.s32 %s58, 1
    %s60 = scalar_select %p57, %s58, %s59
    %p63 = pneg %p57
    %p64 = scmp.eq.s32.totalorder %s10, 3
    %p65 = por %p63, %p64
    %p66 = scmp.ne.s32.totalorder %s58, %s61
    %p67 = scmp.eq.s32.totalorder %s10, 0
    %p68 = por %p66, %p67
    %p69 = scmp.ne.s32.totalorder %s58, %s61
    %p70 = scmp.eq.s32.totalorder %s15, 3
    %p71 = por %p69, %p70
    %p72 = scmp.ne.s32.totalorder %s61, %s62
    %p73 = scmp.eq.s32.totalorder %s15, 0
    %p74 = por %p72, %p73
    %p75 = scmp.ne.s32.totalorder %s61, %s62
    %p76 = scmp.eq.s32.totalorder %s16, 3
    %p77 = por %p75, %p76
    %p79 = scmp.ne.s32.totalorder %s62, %s78
    %p80 = scmp.eq.s32.totalorder %s16, 0
    %p81 = por %p79, %p80
    %s83 = sadd.s32 %s82, 1
    %p86 = scmp.eq.s32.totalorder %s10, 3
    %p87 = scmp.ne.s32.totalorder %s82, %s84
    %p88 = scmp.eq.s32.totalorder %s10, 0
    %p89 = por %p87, %p88
    %p90 = scmp.ne.s32.totalorder %s82, %s84
    %p91 = scmp.eq.s32.totalorder %s15, 3
    %p92 = por %p90, %p91
    %p93 = scmp.ne.s32.totalorder %s84, %s85
    %p94 = scmp.eq.s32.totalorder %s15, 0
    %p95 = por %p93, %p94
    %p96 = scmp.ne.s32.totalorder %s84, %s85
    %p97 = scmp.eq.s32.totalorder %s16, 3
    %p98 = por %p96, %p97
    %p100 = scmp.ne.s32.totalorder %s85, %s99
    %p101 = scmp.eq.s32.totalorder %s16, 0
    %p102 = por %p100, %p101
    %s103 = ssub.s32 %s17, %s29
    %s104 = ssub.s32 %s18, %s25
    %s105 = sor.u32 %s103, %s104
    %p106 = scmp.eq.s32.totalorder %s105, 0
    %s108 = sadd.s32 %s107, 1
    %s109 = scalar_select %p106, %s107, %s108
    %p112 = pneg %p106
    %p113 = scmp.eq.s32.totalorder %s10, 3
    %p114 = por %p112, %p113
    %p115 = scmp.ne.s32.totalorder %s107, %s110
    %p116 = scmp.eq.s32.totalorder %s10, 0
    %p117 = por %p115, %p116
    %p118 = scmp.ne.s32.totalorder %s107, %s110
    %p119 = scmp.eq.s32.totalorder %s15, 3
    %p120 = por %p118, %p119
    %p121 = scmp.ne.s32.totalorder %s110, %s111
    %p122 = scmp.eq.s32.totalorder %s15, 0
    %p123 = por %p121, %p122
    %p124 = scmp.ne.s32.totalorder %s110, %s111
    %p125 = scmp.eq.s32.totalorder %s16, 3
    %p126 = por %p124, %p125
    %p128 = scmp.ne.s32.totalorder %s111, %s127
    %p129 = scmp.eq.s32.totalorder %s16, 0
    %p130 = por %p128, %p129
    %s131 = ssub.s32 %s17, %s29
    %s132 = ssub.s32 %s18, %s25
    %s133 = sor.u32 %s131, %s132
    %p134 = scmp.eq.s32.totalorder %s133, 0
    %s136 = sadd.s32 %s135, 1
    %s137 = scalar_select %p134, %s135, %s136
    %p140 = pneg %p134
    %p141 = scmp.eq.s32.totalorder %s10, 3
    %p142 = por %p140, %p141
    %p143 = scmp.ne.s32.totalorder %s135, %s138
    %p144 = scmp.eq.s32.totalorder %s10, 0
    %p145 = por %p143, %p144
    %p146 = scmp.ne.s32.totalorder %s135, %s138
    %p147 = scmp.eq.s32.totalorder %s15, 3
    %p148 = por %p146, %p147
    %p149 = scmp.ne.s32.totalorder %s138, %s139
    %p150 = scmp.eq.s32.totalorder %s15, 0
    %p151 = por %p149, %p150
    %p152 = scmp.ne.s32.totalorder %s138, %s139
    %p153 = scmp.eq.s32.totalorder %s16, 3
    %p154 = por %p152, %p153
    %p156 = scmp.ne.s32.totalorder %s139, %s155
    %p157 = scmp.eq.s32.totalorder %s16, 0
    %p158 = por %p156, %p157
    %p159 = scmp.le.s32.totalorder 1, %s10
    %p160 = scmp.lt.s32.totalorder %s10, 5
    %p161 = pnand %p159, %p160
    %p162 = pneg %p161
    // Predicated region
    $region9: #{channel_attention_forward.17} parent=5 // pred_check
      _
    $region10: #{channel_attention_forward.17} parent=5 // pred_check_branch
      %164 = sbr.rel (%p161) target = $region12
    $region11: #{channel_attention_forward.17} parent=5 // pred_region
      %s165 = ssub.s32 %s10, 1
      // Predicated region
      $region13: #{channel_attention_forward.17} parent=11 // pred_check
        %p166 = pneg %p95
      $region14: #{channel_attention_forward.17} parent=11 // pred_check_branch
        %168 = sbr.rel (%p166) target = $region16
      $region15: #{channel_attention_forward.17} parent=11 // pred_region
        _
      $region16: #{channel_attention_forward.17} parent=11 // pred_fallthru
        _
    $region12: #{channel_attention_forward.17} parent=5 // pred_fallthru
      _
    %p169 = scmp.lt.s32.totalorder %s10, 4
    // Predicated region
    $region17: #{channel_attention_forward.17} parent=5 // pred_check
      %p170 = pneg %p169
    $region18: #{channel_attention_forward.17} parent=5 // pred_check_branch
      %172 = sbr.rel (%p170) target = $region20
    $region19: #{channel_attention_forward.17} parent=5 // pred_region
      // Predicated region
      $region21: #{channel_attention_forward.17} parent=19 // pred_check
        %p173 = pneg %p42
      $region22: #{channel_attention_forward.17} parent=19 // pred_check_branch
        %175 = sbr.rel (%p173) target = $region24
      $region23: #{channel_attention_forward.17} parent=19 // pred_region
        %p176 = scmp.lt.s32.totalorder %s17, 1
        %s177 = scalar_select %p176, %s17, 1
        %s178 = smul.addr %s177, 2
        %s179 = scalar_lea.vmem %s0, %s178
      $region24: #{channel_attention_forward.17} parent=19 // pred_fallthru
        _
      // Predicated region
      $region25: #{channel_attention_forward.17} parent=19 // pred_check
        %p180 = pneg %p68
      $region26: #{channel_attention_forward.17} parent=19 // pred_check_branch
        %182 = sbr.rel (%p180) target = $region28
      $region27: #{channel_attention_forward.17} parent=19 // pred_region
        %p183 = scmp.lt.s32.totalorder %s17, 1
        %s184 = scalar_select %p183, %s17, 1
        %s185 = smul.addr %s184, 2
        %s186 = scalar_lea.vmem %s1, %s185
      $region28: #{channel_attention_forward.17} parent=19 // pred_fallthru
        _
      // Predicated region
      $region29: #{channel_attention_forward.17} parent=19 // pred_check
        %p187 = pneg %p117
      $region30: #{channel_attention_forward.17} parent=19 // pred_check_branch
        %189 = sbr.rel (%p187) target = $region32
      $region31: #{channel_attention_forward.17} parent=19 // pred_region
        %p190 = scmp.lt.s32.totalorder %s17, 1
        %s191 = scalar_select %p190, %s17, 1
        %p192 = scmp.lt.s32.totalorder %s18, 1
        %s193 = scalar_select %p192, %s18, 1
        %s194 = smul.addr %s191, 2
        %s195 = sadd.s32 %s193, %s194
        %s196 = smul.addr %s195, 2
        %s197 = scalar_lea.vmem %s3, %s196
      $region32: #{channel_attention_forward.17} parent=19 // pred_fallthru
        _
    $region20: #{channel_attention_forward.17} parent=5 // pred_fallthru
      _
    %p198 = scmp.le.s32.totalorder 1, %s10
    %p199 = scmp.lt.s32.totalorder %s10, 5
    %p200 = pnand %p198, %p199
    %p201 = pneg %p200
    // Predicated region
    $region33: #{channel_attention_forward.17} parent=5 // pred_check
      _
    $region34: #{channel_attention_forward.17} parent=5 // pred_check_branch
      %203 = sbr.rel (%p200) target = $region36
    $region35: #{channel_attention_forward.17} parent=5 // pred_region
      %s204 = ssub.s32 %s10, 1
      %p205 = scmp.lt.s32.totalorder %s19, 1
      %s206 = scalar_select %p205, %s19, 1
      %s207 = smul.addr %s206, 2
      %s208 = scalar_lea.vmem %s0, %s207
      %p209 = pneg %p48
      %p210 = pneg %p45
      %p211 = scmp.lt.s32.totalorder %s19, 1
      %s212 = scalar_select %p211, %s19, 1
      %s213 = smul.addr %s212, 2
      %s214 = scalar_lea.vmem %s1, %s213
      %p215 = pneg %p74
      %p216 = pneg %p71
      %p217 = pneg %p95
      %p218 = pneg %p92
      %p219 = scmp.lt.s32.totalorder %s19, 1
      %s220 = scalar_select %p219, %s19, 1
      %p221 = scmp.lt.s32.totalorder %s20, 1
      %s222 = scalar_select %p221, %s20, 1
      %s223 = smul.addr %s220, 2
      %s224 = sadd.s32 %s222, %s223
      %s225 = smul.addr %s224, 2
      %s226 = scalar_lea.vmem %s3, %s225
      %p227 = pneg %p123
      %p228 = pneg %p120
      %p229 = pneg %p151
      %p230 = pneg %p148
      %p231 = scmp.lt.s32.totalorder %s19, 1
      %s232 = scalar_select %p231, %s19, 1
      %p233 = scmp.lt.s32.totalorder %s20, 1
      %s234 = scalar_select %p233, %s20, 1
      %s235 = smul.addr %s232, 2
      %s236 = sadd.s32 %s234, %s235
      %s237 = smul.addr %s236, 2
      %s238 = scalar_lea.vmem %s4, %s237
      %p239 = scmp.lt.s32.totalorder %s19, 1
      %s240 = scalar_select %p239, %s19, 1
      %s241 = smul.addr %s240, 2
      %s242 = scalar_lea.vmem %s0, %s241
      %p243 = scmp.lt.s32.totalorder %s19, 1
      %s244 = scalar_select %p243, %s19, 1
      %s245 = smul.addr %s244, 2
      %s246 = scalar_lea.vmem %s1, %s245
      %p247 = scmp.lt.s32.totalorder %s19, 1
      %s248 = scalar_select %p247, %s19, 1
      %p249 = scmp.lt.s32.totalorder %s20, 1
      %s250 = scalar_select %p249, %s20, 1
      %s251 = smul.addr %s248, 2
      %s252 = sadd.s32 %s250, %s251
      %s253 = smul.addr %s252, 2
      %s254 = scalar_lea.vmem %s3, %s253
      %p255 = scmp.lt.s32.totalorder %s19, 1
      %s256 = scalar_select %p255, %s19, 1
      %p257 = scmp.lt.s32.totalorder %s20, 1
      %s258 = scalar_select %p257, %s20, 1
      %s259 = smul.addr %s256, 2
      %s260 = sadd.s32 %s258, %s259
      %s261 = smul.addr %s260, 2
      %s262 = scalar_lea.vmem %s4, %s261
      %p264 = scmp.eq.s32.totalorder %s20, 0
      // Predicated region
      $region37: #{channel_attention_forward.17} parent=35 // pred_check
        %p265 = pneg %p264
      $region38: #{channel_attention_forward.17} parent=35 // pred_check_branch
        %267 = sbr.rel (%p265) target = $region40
      $region39: #{channel_attention_forward.17} parent=35 // pred_region
        %v268 = vld [vmem:[%s242] sm:$0x3]
        %v269 = vunpack.c.l.bf16 %v268
        %v270 = vld [vmem:[%s246] sm:$0x3]
        %v271 = vunpack.c.l.bf16 %v270
        %vm272 = vcmask 7168
        %v274 = vsel %vm272, %v269, 0
        %v277 = vsel %vm272, %v271, 0
        %279 = vmatprep.subr.mxu0 0.0
        %280 = vmatpush1.xpose.msra.mxu0 %v277
        %281 = vmatprep.subr.mxu0 0.0
        %282 = vmatpush1.xpose.msra.mxu0 0.0
        %283 = vmatprep.subr.mxu0 0.0
        %284 = vmatpush1.xpose.msra.mxu0 0.0
        %285 = vmatprep.subr.mxu0 0.0
        %286 = vmatpush1.xpose.msra.mxu0 0.0
        %287 = vmatprep.subr.mxu0 0.0
        %288 = vmatpush1.xpose.msra.mxu0 0.0
        %289 = vmatprep.subr.mxu0 0.0
        %290 = vmatpush1.xpose.msra.mxu0 0.0
        %291 = vmatprep.subr.mxu0 0.0
        %292 = vmatpush1.xpose.msra.mxu0 0.0
        %293 = vmatprep.subr.mxu0 0.0
        %294 = vmatpush1.xpose.msra.mxu0 0.0
        %295 = vmatprep.subr.mxu0 0.0
        %296 = vmatpush1.xpose.msra.mxu0 0.0
        %297 = vmatprep.subr.mxu0 0.0
        %298 = vmatpush1.xpose.msra.mxu0 0.0
        %299 = vmatprep.subr.mxu0 0.0
        %300 = vmatpush1.xpose.msra.mxu0 0.0
        %301 = vmatprep.subr.mxu0 0.0
        %302 = vmatpush1.xpose.msra.mxu0 0.0
        %303 = vmatprep.subr.mxu0 0.0
        %304 = vmatpush1.xpose.msra.mxu0 0.0
        %305 = vmatprep.subr.mxu0 0.0
        %306 = vmatpush1.xpose.msra.mxu0 0.0
        %307 = vmatprep.subr.mxu0 0.0
        %308 = vmatpush1.xpose.msra.mxu0 0.0
        %309 = vmatprep.subr.mxu0 0.0
        %310 = vmatpush1.xpose.msra.mxu0 0.0
        %311 = vmatprep.subr.mxu0 0.0
        %312 = vmatpush1.xpose.msra.mxu0 0.0
        %313 = vmatprep.subr.mxu0 0.0
        %314 = vmatpush1.xpose.msra.mxu0 0.0
        %315 = vmatprep.subr.mxu0 0.0
        %316 = vmatpush1.xpose.msra.mxu0 0.0
        %317 = vmatprep.subr.mxu0 0.0
        %318 = vmatpush1.xpose.msra.mxu0 0.0
        %319 = vmatprep.subr.mxu0 0.0
        %320 = vmatpush1.xpose.msra.mxu0 0.0
        %321 = vmatprep.subr.mxu0 0.0
        %322 = vmatpush1.xpose.msra.mxu0 0.0
        %323 = vmatprep.subr.mxu0 0.0
        %324 = vmatpush1.xpose.msra.mxu0 0.0
        %325 = vmatprep.subr.mxu0 0.0
        %326 = vmatpush1.xpose.msra.mxu0 0.0
        %327 = vmatprep.subr.mxu0 0.0
        %328 = vmatpush1.xpose.msra.mxu0 0.0
        %329 = vmatprep.subr.mxu0 0.0
        %330 = vmatpush1.xpose.msra.mxu0 0.0
        %331 = vmatprep.subr.mxu0 0.0
        %332 = vmatpush1.xpose.msra.mxu0 0.0
        %333 = vmatprep.subr.mxu0 0.0
        %334 = vmatpush1.xpose.msra.mxu0 0.0
        %335 = vmatprep.subr.mxu0 0.0
        %336 = vmatpush1.xpose.msra.mxu0 0.0
        %337 = vmatprep.subr.mxu0 0.0
        %338 = vmatpush1.xpose.msra.mxu0 0.0
        %339 = vmatprep.subr.mxu0 0.0
        %340 = vmatpush1.xpose.msra.mxu0 0.0
        %341 = vmatprep.subr.mxu0 0.0
        %342 = vmatpush1.xpose.msra.mxu0 0.0
        %343 = vmatprep.mubr.f32.mxu0 0.0
        %344 = vmatmul.mubr.f32.gmra.mrb[0].mxu0 %v274
        %v345 = vpop.f32.mrb[0].mxu0
        %v346 = vadd.f32 0.0, %v345
        %v347 = vpop.f32.mrb[0].mxu0
        %348 = vdwg.mxu0
        %v349 = vmul.f32 %v346, 0.5
        %vm350 = vcmask 27648
        %v351 = vsel %vm350, %v349, -inf
        %352 = vmax.xlane.f32.xlu0 %v351
        %v353 = vpop.xlane.xlu0 %352
        %v354 = vsub.f32 %v349, %v353
        %v355 = vmul.f32 %v354, 1.442695
        %v356 = vpow.pop %v355
        %v357 = vsel %vm350, %v356, 0.0
        %358 = vadd.xlane.f32.xlu0 %v357
        %v359 = vpop.xlane.xlu0 %358
        %v360 = vrcp.pop %v359
        %v361 = vmul.f32 %v356, %v360
        %v362 = vpack.c.bf16 %v361, %v361
        %v363 = vld [vmem:[%s2] sm:$0x3]
        %vm364 = vcmask 31744
        %v366 = vsel %vm364, %v362, 0
        %vm368 = vcmask 1041408
        %v370 = vsel %vm368, %v363, 0
        %372 = vmatprep.subr.bf16.mxu0 0
        %373 = vmatpush1.bf16.msra.mxu0 %v370
        %374 = vmatprep.subr.bf16.mxu0 0
        %375 = vmatpush1.bf16.msra.mxu0 0
        %376 = vmatprep.subr.bf16.mxu0 0
        %377 = vmatpush1.bf16.msra.mxu0 0
        %378 = vmatprep.subr.bf16.mxu0 0
        %379 = vmatpush1.bf16.msra.mxu0 0
        %380 = vmatprep.subr.bf16.mxu0 0
        %381 = vmatpush1.bf16.msra.mxu0 0
        %382 = vmatprep.subr.bf16.mxu0 0
        %383 = vmatpush1.bf16.msra.mxu0 0
        %384 = vmatprep.subr.bf16.mxu0 0
        %385 = vmatpush1.bf16.msra.mxu0 0
        %386 = vmatprep.subr.bf16.mxu0 0
        %387 = vmatpush1.bf16.msra.mxu0 0
        %388 = vmatprep.subr.bf16.mxu0 0
        %389 = vmatpush1.bf16.msra.mxu0 0
        %390 = vmatprep.subr.bf16.mxu0 0
        %391 = vmatpush1.bf16.msra.mxu0 0
        %392 = vmatprep.subr.bf16.mxu0 0
        %393 = vmatpush1.bf16.msra.mxu0 0
        %394 = vmatprep.subr.bf16.mxu0 0
        %395 = vmatpush1.bf16.msra.mxu0 0
        %396 = vmatprep.subr.bf16.mxu0 0
        %397 = vmatpush1.bf16.msra.mxu0 0
        %398 = vmatprep.subr.bf16.mxu0 0
        %399 = vmatpush1.bf16.msra.mxu0 0
        %400 = vmatprep.subr.bf16.mxu0 0
        %401 = vmatpush1.bf16.msra.mxu0 0
        %402 = vmatprep.subr.bf16.mxu0 0
        %403 = vmatpush1.bf16.msra.mxu0 0
        %404 = vmatprep.mubr.bf16.mxu0 0
        %405 = vmatmul.mubr.bf16.gmra.mrb[0].mxu0 %v366
        %v406 = vpop.f32.mrb[0].mxu0
        %v407 = vadd.f32 0.0, %v406
        %v408 = vpop.f32.mrb[0].mxu0
        %v409 = vpop.f32.mrb[0].mxu0
        %v410 = vpop.f32.mrb[0].mxu0
        %411 = vdwg.mxu0
        %v412 = vpack.c.bf16 %v407, %v407
        %vm413 = vcmask 25600
        %414 = vst.msk [vmem:[#allocation2] sm:$0x3] %vm413, %v412
      $region40: #{channel_attention_forward.17} parent=35 // pred_fallthru
        _
      %v415 = vld [vmem:[#allocation2] sm:$0x3]
      %v416 = vld [vmem:[%s254] sm:$0x3]
      %vm417 = vcmask 31744
      %v419 = vsel %vm417, %v415, 0
      %vm421 = vcmask 1041408
      %v423 = vsel %vm421, %v416, 0
      %425 = vmatprep.subr.bf16.mxu0 0
      %426 = vmatpush1.bf16.msra.mxu0 %v423
      %427 = vmatprep.subr.bf16.mxu0 0
      %428 = vmatpush1.bf16.msra.mxu0 0
      %429 = vmatprep.subr.bf16.mxu0 0
      %430 = vmatpush1.bf16.msra.mxu0 0
      %431 = vmatprep.subr.bf16.mxu0 0
      %432 = vmatpush1.bf16.msra.mxu0 0
      %433 = vmatprep.subr.bf16.mxu0 0
      %434 = vmatpush1.bf16.msra.mxu0 0
      %435 = vmatprep.subr.bf16.mxu0 0
      %436 = vmatpush1.bf16.msra.mxu0 0
      %437 = vmatprep.subr.bf16.mxu0 0
      %438 = vmatpush1.bf16.msra.mxu0 0
      %439 = vmatprep.subr.bf16.mxu0 0
      %440 = vmatpush1.bf16.msra.mxu0 0
      %441 = vmatprep.subr.bf16.mxu0 0
      %442 = vmatpush1.bf16.msra.mxu0 0
      %443 = vmatprep.subr.bf16.mxu0 0
      %444 = vmatpush1.bf16.msra.mxu0 0
      %445 = vmatprep.subr.bf16.mxu0 0
      %446 = vmatpush1.bf16.msra.mxu0 0
      %447 = vmatprep.subr.bf16.mxu0 0
      %448 = vmatpush1.bf16.msra.mxu0 0
      %449 = vmatprep.subr.bf16.mxu0 0
      %450 = vmatpush1.bf16.msra.mxu0 0
      %451 = vmatprep.subr.bf16.mxu0 0
      %452 = vmatpush1.bf16.msra.mxu0 0
      %453 = vmatprep.subr.bf16.mxu0 0
      %454 = vmatpush1.bf16.msra.mxu0 0
      %455 = vmatprep.subr.bf16.mxu0 0
      %456 = vmatpush1.bf16.msra.mxu0 0
      %457 = vmatprep.mubr.bf16.mxu0 0
      %458 = vmatmul.mubr.bf16.gmra.mrb[0].mxu0 %v419
      %v459 = vpop.f32.mrb[0].mxu0
      %v460 = vadd.f32 0.0, %v459
      %v461 = vpop.f32.mrb[0].mxu0
      %v462 = vpop.f32.mrb[0].mxu0
      %v463 = vpop.f32.mrb[0].mxu0
      %464 = vdwg.mxu0
      %v465 = vmax.f32 %v460, 0.0
      %v466 = vpack.c.bf16 %v465, %v465
      %467 = vst [vmem:[%s262] sm:$0x3] %v466
      %p468 = scmp.lt.s32.totalorder %s19, 1
      %s469 = scalar_select %p468, %s19, 1
      %p470 = scmp.lt.s32.totalorder %s20, 1
      %s471 = scalar_select %p470, %s20, 1
      %s472 = smul.addr %s469, 2
      %s473 = sadd.s32 %s471, %s472
      %s474 = smul.addr %s473, 2
      %s475 = scalar_lea.vmem %s4, %s474
      // Predicated region
      $region41: #{channel_attention_forward.17} parent=35 // pred_check
        %p476 = pneg %p148
      $region42: #{channel_attention_forward.17} parent=35 // pred_check_branch
        %478 = sbr.rel (%p476) target = $region44
      $region43: #{channel_attention_forward.17} parent=35 // pred_region
        _
      $region44: #{channel_attention_forward.17} parent=35 // pred_fallthru
        _
    $region36: #{channel_attention_forward.17} parent=5 // pred_fallthru
      _
    %p479 = scmp.le.s32.totalorder 2, %s10
    // Predicated region
    $region45: #{channel_attention_forward.17} parent=5 // pred_check
      %p480 = pneg %p479
    $region46: #{channel_attention_forward.17} parent=5 // pred_check_branch
      %482 = sbr.rel (%p480) target = $region48
    $region47: #{channel_attention_forward.17} parent=5 // pred_region
      %s483 = ssub.s32 %s10, 2
      // Predicated region
      $region49: #{channel_attention_forward.17} parent=47 // pred_check
        %p484 = pneg %p154
      $region50: #{channel_attention_forward.17} parent=47 // pred_check_branch
        %486 = sbr.rel (%p484) target = $region52
      $region51: #{channel_attention_forward.17} parent=47 // pred_region
        %p487 = scmp.lt.s32.totalorder %s21, 1
        %s488 = scalar_select %p487, %s21, 1
        %p489 = scmp.lt.s32.totalorder %s22, 1
        %s490 = scalar_select %p489, %s22, 1
        %s491 = smul.addr %s488, 2
        %s492 = sadd.s32 %s490, %s491
        %s493 = smul.addr %s492, 2
        %s494 = scalar_lea.vmem %s4, %s493
      $region52: #{channel_attention_forward.17} parent=47 // pred_fallthru
        _
    $region48: #{channel_attention_forward.17} parent=5 // pred_fallthru
      _
  $region6: #{channel_attention_forward.17} parent=0 // loop_footer
    %s14 = sadd.s32 1, %s10
  $region7: #{channel_attention_forward.17} parent=0 // loop_footer_branch
    %9 = sbr.rel target = $region3
  $region8: #{channel_attention_forward.17} parent=0 // loop_exit
    _

</llo_original>
